<compile_context>
chip_gen: v5e
topology: v5e:2x2
jax: 0.10.0
libtpu: 0.0.40
codegen_flags: <defaults>
</compile_context>

<pallas_src>
import math
from functools import partial

import numpy as np
import jax
import jax.numpy as jnp
from jax.experimental import pallas as pl
from jax.experimental.pallas import tpu as pltpu

NUM_LABELS = 2
NUM_ITERATIONS = 5
_HALF_LOG_2PI = 0.9189385332046727                      # 0.5 * log(2*pi)
_A = math.exp(-0.5)                                     # 3x3x3 Gaussian tap (sigma=1)
_INV_TOTAL = 1.0 / ((1.0 + 2.0 * _A) ** 3 - 1.0)        # 26 off-centre taps, normalized


def _round_up(x, m):
    return (x + m - 1) // m * m


# ----------------------------------------------------------------------------
# Pallas kernel: unary computation + CRF-RNN mean-field iterations
# ----------------------------------------------------------------------------
def _crf_fdr_kernel(w0_ref, img_ref, f1_ref, dh_ref,
                    myl_ref, myh_ref, mdl_ref, mdh_ref,
                    p0_ref, p1_ref, *, height, width):
    """All vector refs are (R, L) f32 slabs: R = pad8(D*H) sublanes, L = pad128(W) lanes."""
    R, L = img_ref.shape
    w0 = w0_ref[0, 0]

    x = img_ref[...]
    # unary_rh = -(w_0 + log N(0,1)(x) - f_1) = f_1 - w_0 + 0.5*x^2 + 0.5*log(2*pi)
    unary_rh = f1_ref[...] - w0 + 0.5 * x * x + _HALF_LOG_2PI
    dh = dh_ref[...]                       # h1 - h0
    du = dh * unary_rh                     # unary1 - unary0

    # Zero-boundary masks, pre-scaled by the Gaussian tap weight.  Lane (W)
    # masks via one in-kernel iota (hoisted out of the iteration loop); row
    # (H/D) masks are precomputed in the wrapper.  Padded lanes/rows are
    # always masked out, so padding never contaminates valid positions.
    lane = jax.lax.broadcasted_iota(jnp.int32, (R, L), 1)
    kxl = jnp.where(lane > 0, _A, 0.0)            # neighbour at x-1 exists
    kxh = jnp.where(lane < width - 1, _A, 0.0)    # neighbour at x+1 exists
    kyl = _A * myl_ref[...]
    kyh = _A * myh_ref[...]
    kdl = _A * mdl_ref[...]
    kdh = _A * mdh_ref[...]

    sh_xl, sh_xh = 1, (L - 1) % L                 # +/-1 along W   (lane rolls)
    sh_yl, sh_yh = 1, (R - 1) % R                 # +/-1 along H   (sublane rolls)
    sh_dl, sh_dh = height % R, (R - height) % R   # +/-1 along D   (sublane rolls)

    def stencil(s):
        # Separable 3x3x3 Gaussian, zero boundary, centre tap removed.
        # Exactly equivalent to the dense (N, N) spatial filter of the
        # reference, but O(27*N) on the VPU/XLU instead of O(N^2).
        t = (s
             + pltpu.roll(s, shift=sh_xl, axis=1) * kxl
             + pltpu.roll(s, shift=sh_xh, axis=1) * kxh)
        t = (t
             + pltpu.roll(t, shift=sh_yl, axis=0) * kyl
             + pltpu.roll(t, shift=sh_yh, axis=0) * kyh)
        t = (t
             + pltpu.roll(t, shift=sh_dl, axis=0) * kdl
             + pltpu.roll(t, shift=sh_dh, axis=0) * kdh)
        return (t - s) * _INV_TOTAL

    # TODO(synk): exact CrfRnn internals (permutohedral bilateral filtering,
    # learned spatial/bilateral/compatibility weights) were not provided with
    # the module; this implements the standard mean-field update with a fixed
    # 3x3x3 spatial Gaussian message-passing stencil and Potts compatibility.
    #
    # Two-label mean field collapsed to one logit difference:
    #   delta = q1 - q0,  p0 - p1 = -tanh(delta/2)
    #   q0' = unary0 - Filt(p1), q1' = unary1 - Filt(p0)
    #   => delta' = du - Filt(p0 - p1) = du + Filt(tanh(delta/2))   (Filt linear)
    delta = dh                               # logits = h.clone()  ->  q1 - q0
    for _ in range(NUM_ITERATIONS):          # short fixed loop: fully unrolled
        t = jnp.tanh(0.5 * delta)            # p1 - p0
        delta = du + stencil(t)

    t = jnp.tanh(0.5 * delta)                # final softmax, division-free
    p1_ref[...] = 0.5 * (1.0 + t)
    p0_ref[...] = 0.5 * (1.0 - t)


# ----------------------------------------------------------------------------
# Wrapper: padding, boundary masks, pallas_call
# ----------------------------------------------------------------------------
@partial(jax.jit, static_argnames=("depth", "height", "width"))
def _crf_forward(w0, image, f1, dh, depth, height, width):
    """image / f1 / dh: (depth*height, width) f32  ->  (2, depth*height, width)."""
    rows = depth * height
    R = _round_up(rows, 8)        # sublane-aligned
    L = _round_up(width, 128)     # lane-aligned (unmasked vst on outputs)

    def pad(a):
        return jnp.pad(a, ((0, R - rows), (0, L - width)))

    img_p, f1_p, dh_p = pad(image), pad(f1), pad(dh)

    # Per-row boundary masks for the H and D axes of the flattened (D*H, W)
    # layout (0/1 floats; padded rows are masked out too).
    r = jnp.arange(R, dtype=jnp.int32)
    y = r % height
    dz = r // height
    row_ok = r < rows
    ones_l = jnp.ones((L,), jnp.float32)

    def rowmask(cond):
        return (cond & row_ok).astype(jnp.float32)[:, None] * ones_l[None, :]

    myl = rowmask(y > 0)
    myh = rowmask(y < height - 1)
    mdl = rowmask(dz > 0)
    mdh = rowmask(dz < depth - 1)

    # TODO(synk): for volumes too large for one core's VMEM, add a 'parallel'
    # grid axis over lane tiles of W (with halo exchange) to use both v7x
    # TensorCores; this problem fits a single core's VMEM many times over.
    kernel = partial(_crf_fdr_kernel, height=height, width=width)
    vmem = pl.BlockSpec(memory_space=pltpu.MemorySpace.VMEM)
    smem = pl.BlockSpec(memory_space=pltpu.MemorySpace.SMEM)
    p0, p1 = pl.pallas_call(
        kernel,
        out_shape=(jax.ShapeDtypeStruct((R, L), jnp.float32),
                   jax.ShapeDtypeStruct((R, L), jnp.float32)),
        in_specs=[smem]              # w_0 scalar
                 + [vmem] * 7,       # image, f_1, dh, 4 row masks
        out_specs=(vmem, vmem),
    )(w0, img_p, f1_p, dh_p, myl, myh, mdl, mdh)

    p0 = p0[:rows, :width]
    p1 = p1[:rows, :width]
    return jnp.stack([p0, p1], axis=0)


# ----------------------------------------------------------------------------
# Host-side (init-time) glue, mirroring the scipy/numpy work in __init__
# ----------------------------------------------------------------------------
_norm_cdf = np.vectorize(lambda v: 0.5 * (1.0 + math.erf(v / math.sqrt(2.0))))


def _qvalue(pvals, threshold=0.3):
    """BH / Storey style q-values (deterministic stand-in for `qvalue`)."""
    p = np.asarray(pvals, dtype=np.float64)
    n = p.size
    pi0 = min(1.0, float(np.mean(p > threshold)) / (1.0 - threshold))
    order = np.argsort(p)
    ranked = p[order]
    q = pi0 * ranked * n / (np.arange(n) + 1.0)
    q = np.minimum.accumulate(q[::-1])[::-1]
    q = np.clip(q, 0.0, 1.0)
    out = np.empty(n, dtype=np.float64)
    out[order] = q
    return out, pi0


def _gaussian_kde_logpdf(vals):
    """1-D gaussian_kde (Scott's rule) logpdf evaluated at the data points."""
    vals = np.asarray(vals, dtype=np.float64)
    m = vals.size
    std = np.std(vals, ddof=1) if m > 1 else 0.0
    if m < 2 or std <= 0.0:
        return np.zeros(m, dtype=np.float64)
    bw = std * m ** (-1.0 / 5.0)
    d2 = (vals[:, None] - vals[None, :]) ** 2 / (bw * bw)
    lse = np.log(np.sum(np.exp(-0.5 * d2), axis=1))
    return lse - np.log(m) - 0.5 * np.log(2.0 * np.pi * bw * bw)


class DenseCRFFDR:
    """JAX/Pallas re-implementation of the PyTorch DenseCRFFDR module."""

    def __init__(self, im):
        self.image = np.asarray(im, dtype=np.float64)     # (1, 1, D, H, W)
        d, h, w = self.image.shape[-3:]
        self.spatial = (d, h, w)

        # p-values and q-values (init-time host glue, like scipy in PyTorch)
        p_value = 2.0 * (1.0 - _norm_cdf(np.fabs(self.image)))
        q_sig = _qvalue(p_value.ravel(), threshold=0.3)[0].reshape(
            (1, 1) + self.image.shape[-3:])

        hh = np.empty((1, NUM_LABELS) + self.image.shape[-3:], dtype=np.float32)
        hh[:, 0:1] = (1.0 - q_sig).astype(np.float32)
        hh[:, 1:2] = q_sig.astype(np.float32)
        self.h = hh

        self.w_0 = np.zeros((1, 1), dtype=np.float32)      # nn.Parameter([0.0])
        self.update_f1(self.h)

    def update_f1(self, h):
        h_flat = h[:, 1].ravel()
        image_flat = self.image.ravel()
        indices = np.where(h_flat > 0.5)[0]
        f1_flat = np.zeros(image_flat.shape, dtype=np.float64)
        if indices.size > 0:
            vals = image_flat[indices]
            f1_flat[indices] = _gaussian_kde_logpdf(vals)
        self.f_1 = f1_flat.reshape(self.image.shape).astype(np.float32)

    def forward(self, image):
        d, h, w = self.spatial
        rows = d * h
        img2 = jnp.asarray(image, jnp.float32).reshape(rows, w)
        f12 = jnp.asarray(self.f_1, jnp.float32).reshape(rows, w)
        h_np = np.asarray(self.h, np.float32).reshape(NUM_LABELS, rows, w)
        dh2 = jnp.asarray(h_np[1] - h_np[0], jnp.float32)   # h1 - h0
        w0 = jnp.asarray(self.w_0, jnp.float32)

        probs = _crf_forward(w0, img2, f12, dh2, d, h, w)   # (2, rows, w)
        h_new = probs.reshape(1, NUM_LABELS, d, h, w)

        self.h = np.asarray(h_new)                          # h = h_new.detach().clone()
        return h_new, jnp.asarray(self.f_1, jnp.float32)

    __call__ = forward


if __name__ == "__main__":
    key = jax.random.PRNGKey(0)
    # small 3-D volume consistent with the module: (batch=1, chan=1, D=4, H=16, W=16)
    im = jax.random.normal(key, (1, 1, 4, 16, 16), dtype=jnp.float32)

    model = DenseCRFFDR(np.asarray(im))
    h_new, f_1 = model(im)

    h_new = jax.block_until_ready(h_new)
    f_1 = jax.block_until_ready(f_1)

    assert h_new.shape == (1, 2, 4, 16, 16)
    assert f_1.shape == (1, 1, 4, 16, 16)
    assert bool(jnp.all(jnp.isfinite(h_new)))
    # label probabilities sum to 1
    assert bool(jnp.allclose(jnp.sum(h_new, axis=1), 1.0, atol=1e-5))

    print("KERNEL_OK")
</pallas_src>

<mosaic_0001>
module attributes {stable_mosaic.version = 11 : i64} {
  func.func @_crf_fdr_kernel(%arg0: memref<1x1xf32, #tpu.memory_space<smem>>, %arg1: memref<64x128xf32, #tpu.memory_space<vmem>>, %arg2: memref<64x128xf32, #tpu.memory_space<vmem>>, %arg3: memref<64x128xf32, #tpu.memory_space<vmem>>, %arg4: memref<64x128xf32, #tpu.memory_space<vmem>>, %arg5: memref<64x128xf32, #tpu.memory_space<vmem>>, %arg6: memref<64x128xf32, #tpu.memory_space<vmem>>, %arg7: memref<64x128xf32, #tpu.memory_space<vmem>>, %arg8: memref<64x128xf32, #tpu.memory_space<vmem>>, %arg9: memref<64x128xf32, #tpu.memory_space<vmem>>) attributes {dimension_semantics = [], scalar_prefetch = 0 : i64, scratch_operands = 0 : i64, tpu.core_type = #tpu.core_type<tc>} {
    %c0 = arith.constant 0 : index
    %c0_0 = arith.constant 0 : index
    %0 = memref.load %arg0[%c0, %c0_0] : memref<1x1xf32, #tpu.memory_space<smem>>
    %c0_1 = arith.constant 0 : index
    %c0_2 = arith.constant 0 : index
    %1 = vector.load %arg1[%c0_1, %c0_2] : memref<64x128xf32, #tpu.memory_space<vmem>>, vector<64x128xf32>
    %c0_3 = arith.constant 0 : index
    %c0_4 = arith.constant 0 : index
    %2 = vector.load %arg2[%c0_3, %c0_4] : memref<64x128xf32, #tpu.memory_space<vmem>>, vector<64x128xf32>
    %3 = vector.broadcast %0 : f32 to vector<64x128xf32>
    %4 = arith.subf %2, %3 : vector<64x128xf32>
    %cst = arith.constant 5.000000e-01 : f32
    %5 = vector.broadcast %cst : f32 to vector<64x128xf32>
    %6 = arith.mulf %5, %1 : vector<64x128xf32>
    %7 = arith.mulf %6, %1 : vector<64x128xf32>
    %8 = arith.addf %4, %7 : vector<64x128xf32>
    %cst_5 = arith.constant 0.918938517 : f32
    %9 = vector.broadcast %cst_5 : f32 to vector<64x128xf32>
    %10 = arith.addf %8, %9 : vector<64x128xf32>
    %c0_6 = arith.constant 0 : index
    %c0_7 = arith.constant 0 : index
    %11 = vector.load %arg3[%c0_6, %c0_7] : memref<64x128xf32, #tpu.memory_space<vmem>>, vector<64x128xf32>
    %12 = arith.mulf %11, %10 : vector<64x128xf32>
    %13 = tpu.iota {dimensions = array<i32: 1>} : vector<64x128xi32>
    %c0_i32 = arith.constant 0 : i32
    %14 = vector.broadcast %c0_i32 : i32 to vector<64x128xi32>
    %15 = arith.cmpi sgt, %13, %14 : vector<64x128xi32>
    %cst_8 = arith.constant 0.606530666 : f32
    %cst_9 = arith.constant 0.000000e+00 : f32
    %16 = vector.broadcast %cst_8 : f32 to vector<64x128xf32>
    %17 = vector.broadcast %cst_9 : f32 to vector<64x128xf32>
    %18 = arith.select %15, %16, %17 : vector<64x128xi1>, vector<64x128xf32>
    %c15_i32 = arith.constant 15 : i32
    %19 = vector.broadcast %c15_i32 : i32 to vector<64x128xi32>
    %20 = arith.cmpi slt, %13, %19 : vector<64x128xi32>
    %cst_10 = arith.constant 0.606530666 : f32
    %cst_11 = arith.constant 0.000000e+00 : f32
    %21 = vector.broadcast %cst_10 : f32 to vector<64x128xf32>
    %22 = vector.broadcast %cst_11 : f32 to vector<64x128xf32>
    %23 = arith.select %20, %21, %22 : vector<64x128xi1>, vector<64x128xf32>
    %c0_12 = arith.constant 0 : index
    %c0_13 = arith.constant 0 : index
    %24 = vector.load %arg4[%c0_12, %c0_13] : memref<64x128xf32, #tpu.memory_space<vmem>>, vector<64x128xf32>
    %cst_14 = arith.constant 0.606530666 : f32
    %25 = vector.broadcast %cst_14 : f32 to vector<64x128xf32>
    %26 = arith.mulf %25, %24 : vector<64x128xf32>
    %c0_15 = arith.constant 0 : index
    %c0_16 = arith.constant 0 : index
    %27 = vector.load %arg5[%c0_15, %c0_16] : memref<64x128xf32, #tpu.memory_space<vmem>>, vector<64x128xf32>
    %cst_17 = arith.constant 0.606530666 : f32
    %28 = vector.broadcast %cst_17 : f32 to vector<64x128xf32>
    %29 = arith.mulf %28, %27 : vector<64x128xf32>
    %c0_18 = arith.constant 0 : index
    %c0_19 = arith.constant 0 : index
    %30 = vector.load %arg6[%c0_18, %c0_19] : memref<64x128xf32, #tpu.memory_space<vmem>>, vector<64x128xf32>
    %cst_20 = arith.constant 0.606530666 : f32
    %31 = vector.broadcast %cst_20 : f32 to vector<64x128xf32>
    %32 = arith.mulf %31, %30 : vector<64x128xf32>
    %c0_21 = arith.constant 0 : index
    %c0_22 = arith.constant 0 : index
    %33 = vector.load %arg7[%c0_21, %c0_22] : memref<64x128xf32, #tpu.memory_space<vmem>>, vector<64x128xf32>
    %cst_23 = arith.constant 0.606530666 : f32
    %34 = vector.broadcast %cst_23 : f32 to vector<64x128xf32>
    %35 = arith.mulf %34, %33 : vector<64x128xf32>
    %cst_24 = arith.constant 5.000000e-01 : f32
    %36 = vector.broadcast %cst_24 : f32 to vector<64x128xf32>
    %37 = arith.mulf %36, %11 : vector<64x128xf32>
    %38 = math.tanh %37 : vector<64x128xf32>
    %c1_i32 = arith.constant 1 : i32
    %39 = tpu.dynamic_rotate %38 by %c1_i32 dim 1 : vector<64x128xf32>, i32 -> vector<64x128xf32>
    %40 = arith.mulf %39, %18 : vector<64x128xf32>
    %41 = arith.addf %38, %40 : vector<64x128xf32>
    %c127_i32 = arith.constant 127 : i32
    %42 = tpu.dynamic_rotate %38 by %c127_i32 dim 1 : vector<64x128xf32>, i32 -> vector<64x128xf32>
    %43 = arith.mulf %42, %23 : vector<64x128xf32>
    %44 = arith.addf %41, %43 : vector<64x128xf32>
    %c1_i32_25 = arith.constant 1 : i32
    %45 = tpu.dynamic_rotate %44 by %c1_i32_25 dim 0 : vector<64x128xf32>, i32 -> vector<64x128xf32>
    %46 = arith.mulf %45, %26 : vector<64x128xf32>
    %47 = arith.addf %44, %46 : vector<64x128xf32>
    %c63_i32 = arith.constant 63 : i32
    %48 = tpu.dynamic_rotate %44 by %c63_i32 dim 0 : vector<64x128xf32>, i32 -> vector<64x128xf32>
    %49 = arith.mulf %48, %29 : vector<64x128xf32>
    %50 = arith.addf %47, %49 : vector<64x128xf32>
    %c16_i32 = arith.constant 16 : i32
    %51 = tpu.dynamic_rotate %50 by %c16_i32 dim 0 : vector<64x128xf32>, i32 -> vector<64x128xf32>
    %52 = arith.mulf %51, %32 : vector<64x128xf32>
    %53 = arith.addf %50, %52 : vector<64x128xf32>
    %c48_i32 = arith.constant 48 : i32
    %54 = tpu.dynamic_rotate %50 by %c48_i32 dim 0 : vector<64x128xf32>, i32 -> vector<64x128xf32>
    %55 = arith.mulf %54, %35 : vector<64x128xf32>
    %56 = arith.addf %53, %55 : vector<64x128xf32>
    %57 = arith.subf %56, %38 : vector<64x128xf32>
    %cst_26 = arith.constant 0.10163863 : f32
    %58 = vector.broadcast %cst_26 : f32 to vector<64x128xf32>
    %59 = arith.mulf %57, %58 : vector<64x128xf32>
    %60 = arith.addf %12, %59 : vector<64x128xf32>
    %cst_27 = arith.constant 5.000000e-01 : f32
    %61 = vector.broadcast %cst_27 : f32 to vector<64x128xf32>
    %62 = arith.mulf %61, %60 : vector<64x128xf32>
    %63 = math.tanh %62 : vector<64x128xf32>
    %c1_i32_28 = arith.constant 1 : i32
    %64 = tpu.dynamic_rotate %63 by %c1_i32_28 dim 1 : vector<64x128xf32>, i32 -> vector<64x128xf32>
    %65 = arith.mulf %64, %18 : vector<64x128xf32>
    %66 = arith.addf %63, %65 : vector<64x128xf32>
    %c127_i32_29 = arith.constant 127 : i32
    %67 = tpu.dynamic_rotate %63 by %c127_i32_29 dim 1 : vector<64x128xf32>, i32 -> vector<64x128xf32>
    %68 = arith.mulf %67, %23 : vector<64x128xf32>
    %69 = arith.addf %66, %68 : vector<64x128xf32>
    %c1_i32_30 = arith.constant 1 : i32
    %70 = tpu.dynamic_rotate %69 by %c1_i32_30 dim 0 : vector<64x128xf32>, i32 -> vector<64x128xf32>
    %71 = arith.mulf %70, %26 : vector<64x128xf32>
    %72 = arith.addf %69, %71 : vector<64x128xf32>
    %c63_i32_31 = arith.constant 63 : i32
    %73 = tpu.dynamic_rotate %69 by %c63_i32_31 dim 0 : vector<64x128xf32>, i32 -> vector<64x128xf32>
    %74 = arith.mulf %73, %29 : vector<64x128xf32>
    %75 = arith.addf %72, %74 : vector<64x128xf32>
    %c16_i32_32 = arith.constant 16 : i32
    %76 = tpu.dynamic_rotate %75 by %c16_i32_32 dim 0 : vector<64x128xf32>, i32 -> vector<64x128xf32>
    %77 = arith.mulf %76, %32 : vector<64x128xf32>
    %78 = arith.addf %75, %77 : vector<64x128xf32>
    %c48_i32_33 = arith.constant 48 : i32
    %79 = tpu.dynamic_rotate %75 by %c48_i32_33 dim 0 : vector<64x128xf32>, i32 -> vector<64x128xf32>
    %80 = arith.mulf %79, %35 : vector<64x128xf32>
    %81 = arith.addf %78, %80 : vector<64x128xf32>
    %82 = arith.subf %81, %63 : vector<64x128xf32>
    %cst_34 = arith.constant 0.10163863 : f32
    %83 = vector.broadcast %cst_34 : f32 to vector<64x128xf32>
    %84 = arith.mulf %82, %83 : vector<64x128xf32>
    %85 = arith.addf %12, %84 : vector<64x128xf32>
    %cst_35 = arith.constant 5.000000e-01 : f32
    %86 = vector.broadcast %cst_35 : f32 to vector<64x128xf32>
    %87 = arith.mulf %86, %85 : vector<64x128xf32>
    %88 = math.tanh %87 : vector<64x128xf32>
    %c1_i32_36 = arith.constant 1 : i32
    %89 = tpu.dynamic_rotate %88 by %c1_i32_36 dim 1 : vector<64x128xf32>, i32 -> vector<64x128xf32>
    %90 = arith.mulf %89, %18 : vector<64x128xf32>
    %91 = arith.addf %88, %90 : vector<64x128xf32>
    %c127_i32_37 = arith.constant 127 : i32
    %92 = tpu.dynamic_rotate %88 by %c127_i32_37 dim 1 : vector<64x128xf32>, i32 -> vector<64x128xf32>
    %93 = arith.mulf %92, %23 : vector<64x128xf32>
    %94 = arith.addf %91, %93 : vector<64x128xf32>
    %c1_i32_38 = arith.constant 1 : i32
    %95 = tpu.dynamic_rotate %94 by %c1_i32_38 dim 0 : vector<64x128xf32>, i32 -> vector<64x128xf32>
    %96 = arith.mulf %95, %26 : vector<64x128xf32>
    %97 = arith.addf %94, %96 : vector<64x128xf32>
    %c63_i32_39 = arith.constant 63 : i32
    %98 = tpu.dynamic_rotate %94 by %c63_i32_39 dim 0 : vector<64x128xf32>, i32 -> vector<64x128xf32>
    %99 = arith.mulf %98, %29 : vector<64x128xf32>
    %100 = arith.addf %97, %99 : vector<64x128xf32>
    %c16_i32_40 = arith.constant 16 : i32
    %101 = tpu.dynamic_rotate %100 by %c16_i32_40 dim 0 : vector<64x128xf32>, i32 -> vector<64x128xf32>
    %102 = arith.mulf %101, %32 : vector<64x128xf32>
    %103 = arith.addf %100, %102 : vector<64x128xf32>
    %c48_i32_41 = arith.constant 48 : i32
    %104 = tpu.dynamic_rotate %100 by %c48_i32_41 dim 0 : vector<64x128xf32>, i32 -> vector<64x128xf32>
    %105 = arith.mulf %104, %35 : vector<64x128xf32>
    %106 = arith.addf %103, %105 : vector<64x128xf32>
    %107 = arith.subf %106, %88 : vector<64x128xf32>
    %cst_42 = arith.constant 0.10163863 : f32
    %108 = vector.broadcast %cst_42 : f32 to vector<64x128xf32>
    %109 = arith.mulf %107, %108 : vector<64x128xf32>
    %110 = arith.addf %12, %109 : vector<64x128xf32>
    %cst_43 = arith.constant 5.000000e-01 : f32
    %111 = vector.broadcast %cst_43 : f32 to vector<64x128xf32>
    %112 = arith.mulf %111, %110 : vector<64x128xf32>
    %113 = math.tanh %112 : vector<64x128xf32>
    %c1_i32_44 = arith.constant 1 : i32
    %114 = tpu.dynamic_rotate %113 by %c1_i32_44 dim 1 : vector<64x128xf32>, i32 -> vector<64x128xf32>
    %115 = arith.mulf %114, %18 : vector<64x128xf32>
    %116 = arith.addf %113, %115 : vector<64x128xf32>
    %c127_i32_45 = arith.constant 127 : i32
    %117 = tpu.dynamic_rotate %113 by %c127_i32_45 dim 1 : vector<64x128xf32>, i32 -> vector<64x128xf32>
    %118 = arith.mulf %117, %23 : vector<64x128xf32>
    %119 = arith.addf %116, %118 : vector<64x128xf32>
    %c1_i32_46 = arith.constant 1 : i32
    %120 = tpu.dynamic_rotate %119 by %c1_i32_46 dim 0 : vector<64x128xf32>, i32 -> vector<64x128xf32>
    %121 = arith.mulf %120, %26 : vector<64x128xf32>
    %122 = arith.addf %119, %121 : vector<64x128xf32>
    %c63_i32_47 = arith.constant 63 : i32
    %123 = tpu.dynamic_rotate %119 by %c63_i32_47 dim 0 : vector<64x128xf32>, i32 -> vector<64x128xf32>
    %124 = arith.mulf %123, %29 : vector<64x128xf32>
    %125 = arith.addf %122, %124 : vector<64x128xf32>
    %c16_i32_48 = arith.constant 16 : i32
    %126 = tpu.dynamic_rotate %125 by %c16_i32_48 dim 0 : vector<64x128xf32>, i32 -> vector<64x128xf32>
    %127 = arith.mulf %126, %32 : vector<64x128xf32>
    %128 = arith.addf %125, %127 : vector<64x128xf32>
    %c48_i32_49 = arith.constant 48 : i32
    %129 = tpu.dynamic_rotate %125 by %c48_i32_49 dim 0 : vector<64x128xf32>, i32 -> vector<64x128xf32>
    %130 = arith.mulf %129, %35 : vector<64x128xf32>
    %131 = arith.addf %128, %130 : vector<64x128xf32>
    %132 = arith.subf %131, %113 : vector<64x128xf32>
    %cst_50 = arith.constant 0.10163863 : f32
    %133 = vector.broadcast %cst_50 : f32 to vector<64x128xf32>
    %134 = arith.mulf %132, %133 : vector<64x128xf32>
    %135 = arith.addf %12, %134 : vector<64x128xf32>
    %cst_51 = arith.constant 5.000000e-01 : f32
    %136 = vector.broadcast %cst_51 : f32 to vector<64x128xf32>
    %137 = arith.mulf %136, %135 : vector<64x128xf32>
    %138 = math.tanh %137 : vector<64x128xf32>
    %c1_i32_52 = arith.constant 1 : i32
    %139 = tpu.dynamic_rotate %138 by %c1_i32_52 dim 1 : vector<64x128xf32>, i32 -> vector<64x128xf32>
    %140 = arith.mulf %139, %18 : vector<64x128xf32>
    %141 = arith.addf %138, %140 : vector<64x128xf32>
    %c127_i32_53 = arith.constant 127 : i32
    %142 = tpu.dynamic_rotate %138 by %c127_i32_53 dim 1 : vector<64x128xf32>, i32 -> vector<64x128xf32>
    %143 = arith.mulf %142, %23 : vector<64x128xf32>
    %144 = arith.addf %141, %143 : vector<64x128xf32>
    %c1_i32_54 = arith.constant 1 : i32
    %145 = tpu.dynamic_rotate %144 by %c1_i32_54 dim 0 : vector<64x128xf32>, i32 -> vector<64x128xf32>
    %146 = arith.mulf %145, %26 : vector<64x128xf32>
    %147 = arith.addf %144, %146 : vector<64x128xf32>
    %c63_i32_55 = arith.constant 63 : i32
    %148 = tpu.dynamic_rotate %144 by %c63_i32_55 dim 0 : vector<64x128xf32>, i32 -> vector<64x128xf32>
    %149 = arith.mulf %148, %29 : vector<64x128xf32>
    %150 = arith.addf %147, %149 : vector<64x128xf32>
    %c16_i32_56 = arith.constant 16 : i32
    %151 = tpu.dynamic_rotate %150 by %c16_i32_56 dim 0 : vector<64x128xf32>, i32 -> vector<64x128xf32>
    %152 = arith.mulf %151, %32 : vector<64x128xf32>
    %153 = arith.addf %150, %152 : vector<64x128xf32>
    %c48_i32_57 = arith.constant 48 : i32
    %154 = tpu.dynamic_rotate %150 by %c48_i32_57 dim 0 : vector<64x128xf32>, i32 -> vector<64x128xf32>
    %155 = arith.mulf %154, %35 : vector<64x128xf32>
    %156 = arith.addf %153, %155 : vector<64x128xf32>
    %157 = arith.subf %156, %138 : vector<64x128xf32>
    %cst_58 = arith.constant 0.10163863 : f32
    %158 = vector.broadcast %cst_58 : f32 to vector<64x128xf32>
    %159 = arith.mulf %157, %158 : vector<64x128xf32>
    %160 = arith.addf %12, %159 : vector<64x128xf32>
    %cst_59 = arith.constant 5.000000e-01 : f32
    %161 = vector.broadcast %cst_59 : f32 to vector<64x128xf32>
    %162 = arith.mulf %161, %160 : vector<64x128xf32>
    %163 = math.tanh %162 : vector<64x128xf32>
    %cst_60 = arith.constant 1.000000e+00 : f32
    %164 = vector.broadcast %cst_60 : f32 to vector<64x128xf32>
    %165 = arith.addf %164, %163 : vector<64x128xf32>
    %cst_61 = arith.constant 5.000000e-01 : f32
    %166 = vector.broadcast %cst_61 : f32 to vector<64x128xf32>
    %167 = arith.mulf %166, %165 : vector<64x128xf32>
    %c0_62 = arith.constant 0 : index
    %c0_63 = arith.constant 0 : index
    %168 = vector.load %arg9[%c0_62, %c0_63] : memref<64x128xf32, #tpu.memory_space<vmem>>, vector<64x128xf32>
    tpu.vector_store %arg9[%c0_62, %c0_63], %167 {strides = array<i32>} : memref<64x128xf32, #tpu.memory_space<vmem>>, vector<64x128xf32>,
    %cst_64 = arith.constant 1.000000e+00 : f32
    %169 = vector.broadcast %cst_64 : f32 to vector<64x128xf32>
    %170 = arith.subf %169, %163 : vector<64x128xf32>
    %cst_65 = arith.constant 5.000000e-01 : f32
    %171 = vector.broadcast %cst_65 : f32 to vector<64x128xf32>
    %172 = arith.mulf %171, %170 : vector<64x128xf32>
    %c0_66 = arith.constant 0 : index
    %c0_67 = arith.constant 0 : index
    %173 = vector.load %arg8[%c0_66, %c0_67] : memref<64x128xf32, #tpu.memory_space<vmem>>, vector<64x128xf32>
    tpu.vector_store %arg8[%c0_66, %c0_67], %172 {strides = array<i32>} : memref<64x128xf32, #tpu.memory_space<vmem>>, vector<64x128xf32>,
    return
  }
}

</mosaic_0001>

<llo_original>
// kernel: mul.23
$region0: #{mul.23}
  #allocation0 [shape = 's32[1]{0}', space=sflag, size = 0x4, scoped, tag = 'scoped memory for mul.23']
  %s0 = inlined_call_operand.vmem [shape: f32[64], index: 0, kind: input, shape index: {}]
  %s1 = inlined_call_operand.vmem [shape: f32[64,128], index: 1, kind: output, shape index: {}]
  // Predicated region
  $region2: #{mul.23} parent=0 // pred_check
    _
  $region3: #{mul.23} parent=0 // pred_check_branch
    %3 = sbr.rel (0) target = $region5
  $region4: #{mul.23} parent=0 // pred_region
    _
  $region5: #{mul.23} parent=0 // pred_fallthru
    _
  %v4 = vld [vmem:[%s0] ss:$0 sm:$0xff]
  %v5 = vlaneseq
  %v6 = vshrl.u32 %v5, 7
  %8 = vset.pattern.permute.xlu0 %v6
  %9 = vperm.xlu0 %8, %v4
  %v10 = vpop.permute.xlu0 %9
  %11 = vst [vmem:[%s1] sm:$0xff] %v10
  %v12 = vld [vmem:[%s0] ss:$0 sm:$0xff]
  %v13 = vlaneseq
  %v14 = vshrl.u32 %v13, 7
  %v15 = vadd.s32 %v14, 8
  %16 = vset.pattern.permute.xlu0 %v15
  %17 = vperm.xlu0 %16, %v12
  %v18 = vpop.permute.xlu0 %17
  %s19 = scalar_lea.vmem %s1, 8
  %20 = vst [vmem:[%s19] sm:$0xff] %v18
  %v21 = vld [vmem:[%s0] ss:$0 sm:$0xff]
  %v22 = vlaneseq
  %v23 = vshrl.u32 %v22, 7
  %v24 = vadd.s32 %v23, 16
  %25 = vset.pattern.permute.xlu0 %v24
  %26 = vperm.xlu0 %25, %v21
  %v27 = vpop.permute.xlu0 %26
  %s28 = scalar_lea.vmem %s1, 16
  %29 = vst [vmem:[%s28] sm:$0xff] %v27
  %v30 = vld [vmem:[%s0] ss:$0 sm:$0xff]
  %v31 = vlaneseq
  %v32 = vshrl.u32 %v31, 7
  %v33 = vadd.s32 %v32, 24
  %34 = vset.pattern.permute.xlu0 %v33
  %35 = vperm.xlu0 %34, %v30
  %v36 = vpop.permute.xlu0 %35
  %s37 = scalar_lea.vmem %s1, 24
  %38 = vst [vmem:[%s37] sm:$0xff] %v36
  %v39 = vld [vmem:[%s0] ss:$0 sm:$0xff]
  %v40 = vlaneseq
  %v41 = vshrl.u32 %v40, 7
  %v42 = vadd.s32 %v41, 32
  %43 = vset.pattern.permute.xlu0 %v42
  %44 = vperm.xlu0 %43, %v39
  %v45 = vpop.permute.xlu0 %44
  %s46 = scalar_lea.vmem %s1, 32
  %47 = vst [vmem:[%s46] sm:$0xff] %v45
  %v48 = vld [vmem:[%s0] ss:$0 sm:$0xff]
  %v49 = vlaneseq
  %v50 = vshrl.u32 %v49, 7
  %v51 = vadd.s32 %v50, 40
  %52 = vset.pattern.permute.xlu0 %v51
  %53 = vperm.xlu0 %52, %v48
  %v54 = vpop.permute.xlu0 %53
  %s55 = scalar_lea.vmem %s1, 40
  %56 = vst [vmem:[%s55] sm:$0xff] %v54
  %v57 = vld [vmem:[%s0] ss:$0 sm:$0xff]
  %v58 = vlaneseq
  %v59 = vshrl.u32 %v58, 7
  %v60 = vadd.s32 %v59, 48
  %61 = vset.pattern.permute.xlu0 %v60
  %62 = vperm.xlu0 %61, %v57
  %v63 = vpop.permute.xlu0 %62
  %s64 = scalar_lea.vmem %s1, 48
  %65 = vst [vmem:[%s64] sm:$0xff] %v63
  %v66 = vld [vmem:[%s0] ss:$0 sm:$0xff]
  %v67 = vlaneseq
  %v68 = vshrl.u32 %v67, 7
  %v69 = vadd.s32 %v68, 56
  %70 = vset.pattern.permute.xlu0 %v69
  %71 = vperm.xlu0 %70, %v66
  %v72 = vpop.permute.xlu0 %71
  %s73 = scalar_lea.vmem %s1, 56
  %74 = vst [vmem:[%s73] sm:$0xff] %v72

// kernel: _crf_forward.1
$region0: #{_crf_forward.1}
  #allocation0 [shape = 'u32[]', space=smem, size = 0x4, offset = 0x4, fixed_abs, tag = 'smem constant byte address 0x4 - core index']
  #allocation1 [shape = 'u32[72,128]{1,0:T(1,128)}', space=vmem, size = 0x9000, scoped, tag = 'internal scratch']
  #allocation2 [shape = 'f32[1,1]{1,0:T(1,128)S(6)}', space=smem, size = 0x200, scoped, tag = 'scoped memory for _crf_forward.1']
  %s0 = inlined_call_operand.<no memory space> [shape: f32[1,1], index: 0, kind: input, shape index: {}]
  %s1 = inlined_call_operand.vmem [shape: f32[64,128], index: 1, kind: input, shape index: {}]
  %s2 = inlined_call_operand.vmem [shape: f32[64,128], index: 2, kind: input, shape index: {}]
  %s3 = inlined_call_operand.vmem [shape: f32[64,128], index: 3, kind: input, shape index: {}]
  %s4 = inlined_call_operand.vmem [shape: f32[64,128], index: 4, kind: input, shape index: {}]
  %s5 = inlined_call_operand.vmem [shape: f32[64,128], index: 5, kind: input, shape index: {}]
  %s6 = inlined_call_operand.vmem [shape: f32[64,128], index: 6, kind: input, shape index: {}]
  %s7 = inlined_call_operand.vmem [shape: f32[64,128], index: 7, kind: input, shape index: {}]
  %s8 = inlined_call_operand.vmem [shape: f32[64,128], index: 8, kind: output, shape index: {0}]
  %s9 = inlined_call_operand.vmem [shape: f32[64,128], index: 9, kind: output, shape index: {1}]
  %10 = xla_tuple %s8, %s9
  %s11 = sld [smem:[#allocation0]]
  $region50: #{_crf_forward.1} parent=0
    _
  %s13 = ssub.s32 1, %s11
  %s14 = scalar_select 0, %s13, %s11
  %15 = sst [smem:[#allocation2]] %s0
  // Predicated region
  $region2: #{_crf_forward.1} parent=0 // pred_check
    _
  $region3: #{_crf_forward.1} parent=0 // pred_check_branch
    %17 = sbr.rel (0) target = $region5
  $region4: #{_crf_forward.1} parent=0 // pred_region
    _
  $region5: #{_crf_forward.1} parent=0 // pred_fallthru
    _
  // Predicated region
  $region6: #{_crf_forward.1} parent=0 // pred_check
    _
  $region7: #{_crf_forward.1} parent=0 // pred_check_branch
    %19 = sbr.rel (0) target = $region9
  $region8: #{_crf_forward.1} parent=0 // pred_region
    _
  $region9: #{_crf_forward.1} parent=0 // pred_fallthru
    _
  // Predicated region
  $region10: #{_crf_forward.1} parent=0 // pred_check
    _
  $region11: #{_crf_forward.1} parent=0 // pred_check_branch
    %21 = sbr.rel (0) target = $region13
  $region12: #{_crf_forward.1} parent=0 // pred_region
    _
  $region13: #{_crf_forward.1} parent=0 // pred_fallthru
    _
  // Predicated region
  $region14: #{_crf_forward.1} parent=0 // pred_check
    _
  $region15: #{_crf_forward.1} parent=0 // pred_check_branch
    %23 = sbr.rel (0) target = $region17
  $region16: #{_crf_forward.1} parent=0 // pred_region
    _
  $region17: #{_crf_forward.1} parent=0 // pred_fallthru
    _
  // Predicated region
  $region18: #{_crf_forward.1} parent=0 // pred_check
    _
  $region19: #{_crf_forward.1} parent=0 // pred_check_branch
    %25 = sbr.rel (0) target = $region21
  $region20: #{_crf_forward.1} parent=0 // pred_region
    _
  $region21: #{_crf_forward.1} parent=0 // pred_fallthru
    _
  // Predicated region
  $region22: #{_crf_forward.1} parent=0 // pred_check
    _
  $region23: #{_crf_forward.1} parent=0 // pred_check_branch
    %27 = sbr.rel (0) target = $region25
  $region24: #{_crf_forward.1} parent=0 // pred_region
    _
  $region25: #{_crf_forward.1} parent=0 // pred_fallthru
    _
  // Predicated region
  $region26: #{_crf_forward.1} parent=0 // pred_check
    _
  $region27: #{_crf_forward.1} parent=0 // pred_check_branch
    %29 = sbr.rel (0) target = $region29
  $region28: #{_crf_forward.1} parent=0 // pred_region
    _
  $region29: #{_crf_forward.1} parent=0 // pred_fallthru
    _
  // Predicated region
  $region30: #{_crf_forward.1} parent=0 // pred_check
    _
  $region31: #{_crf_forward.1} parent=0 // pred_check_branch
    %31 = sbr.rel (0) target = $region33
  $region32: #{_crf_forward.1} parent=0 // pred_region
    _
  $region33: #{_crf_forward.1} parent=0 // pred_fallthru
    _
  %s32 = sld [smem:[#allocation2]]
  %v33 = vld [vmem:[%s1] sm:$0xff]
  %v34 = vld [vmem:[%s1 + $0x8] sm:$0xff]
  %v35 = vld [vmem:[%s1 + $0x10] sm:$0xff]
  %v36 = vld [vmem:[%s1 + $0x18] sm:$0xff]
  %v37 = vld [vmem:[%s1 + $0x20] sm:$0xff]
  %v38 = vld [vmem:[%s1 + $0x28] sm:$0xff]
  %v39 = vld [vmem:[%s1 + $0x30] sm:$0xff]
  %v40 = vld [vmem:[%s1 + $0x38] sm:$0xff]
  %v41 = vld [vmem:[%s2] sm:$0xff]
  %v42 = vld [vmem:[%s2 + $0x8] sm:$0xff]
  %v43 = vld [vmem:[%s2 + $0x10] sm:$0xff]
  %v44 = vld [vmem:[%s2 + $0x18] sm:$0xff]
  %v45 = vld [vmem:[%s2 + $0x20] sm:$0xff]
  %v46 = vld [vmem:[%s2 + $0x28] sm:$0xff]
  %v47 = vld [vmem:[%s2 + $0x30] sm:$0xff]
  %v48 = vld [vmem:[%s2 + $0x38] sm:$0xff]
  %v49 = vstv %s32
  %v50 = vsub.f32 %v41, %v49
  %v51 = vsub.f32 %v42, %v49
  %v52 = vsub.f32 %v43, %v49
  %v53 = vsub.f32 %v44, %v49
  %v54 = vsub.f32 %v45, %v49
  %v55 = vsub.f32 %v46, %v49
  %v56 = vsub.f32 %v47, %v49
  %v57 = vsub.f32 %v48, %v49
  %v58 = vmul.f32 %v33, 0.5
  %v59 = vmul.f32 %v34, 0.5
  %v60 = vmul.f32 %v35, 0.5
  %v61 = vmul.f32 %v36, 0.5
  %v62 = vmul.f32 %v37, 0.5
  %v63 = vmul.f32 %v38, 0.5
  %v64 = vmul.f32 %v39, 0.5
  %v65 = vmul.f32 %v40, 0.5
  %v66 = vmul.f32 %v58, %v33
  %v67 = vmul.f32 %v59, %v34
  %v68 = vmul.f32 %v60, %v35
  %v69 = vmul.f32 %v61, %v36
  %v70 = vmul.f32 %v62, %v37
  %v71 = vmul.f32 %v63, %v38
  %v72 = vmul.f32 %v64, %v39
  %v73 = vmul.f32 %v65, %v40
  %v74 = vadd.f32 %v50, %v66
  %v75 = vadd.f32 %v51, %v67
  %v76 = vadd.f32 %v52, %v68
  %v77 = vadd.f32 %v53, %v69
  %v78 = vadd.f32 %v54, %v70
  %v79 = vadd.f32 %v55, %v71
  %v80 = vadd.f32 %v56, %v72
  %v81 = vadd.f32 %v57, %v73
  %v82 = vadd.f32 %v74, 0.9189385
  %v83 = vadd.f32 %v75, 0.9189385
  %v84 = vadd.f32 %v76, 0.9189385
  %v85 = vadd.f32 %v77, 0.9189385
  %v86 = vadd.f32 %v78, 0.9189385
  %v87 = vadd.f32 %v79, 0.9189385
  %v88 = vadd.f32 %v80, 0.9189385
  %v89 = vadd.f32 %v81, 0.9189385
  %v90 = vld [vmem:[%s3] sm:$0xff]
  %v91 = vld [vmem:[%s3 + $0x8] sm:$0xff]
  %v92 = vld [vmem:[%s3 + $0x10] sm:$0xff]
  %v93 = vld [vmem:[%s3 + $0x18] sm:$0xff]
  %v94 = vld [vmem:[%s3 + $0x20] sm:$0xff]
  %v95 = vld [vmem:[%s3 + $0x28] sm:$0xff]
  %v96 = vld [vmem:[%s3 + $0x30] sm:$0xff]
  %v97 = vld [vmem:[%s3 + $0x38] sm:$0xff]
  %v98 = vmul.f32 %v90, %v82
  %v99 = vmul.f32 %v91, %v83
  %v100 = vmul.f32 %v92, %v84
  %v101 = vmul.f32 %v93, %v85
  %v102 = vmul.f32 %v94, %v86
  %v103 = vmul.f32 %v95, %v87
  %v104 = vmul.f32 %v96, %v88
  %v105 = vmul.f32 %v97, %v89
  %v106 = vlaneseq
  %v107 = vand.u32 %v106, 127
  %vm108 = vcmp.gt.s32.totalorder %v107, 0
  %v109 = vsel %vm108, 0.60653067, 0.0
  %vm110 = vcmp.lt.s32.totalorder %v107, 15
  %v111 = vsel %vm110, 0.60653067, 0.0
  %v112 = vld [vmem:[%s4] sm:$0xff]
  %v113 = vld [vmem:[%s4 + $0x8] sm:$0xff]
  %v114 = vld [vmem:[%s4 + $0x10] sm:$0xff]
  %v115 = vld [vmem:[%s4 + $0x18] sm:$0xff]
  %v116 = vld [vmem:[%s4 + $0x20] sm:$0xff]
  %v117 = vld [vmem:[%s4 + $0x28] sm:$0xff]
  %v118 = vld [vmem:[%s4 + $0x30] sm:$0xff]
  %v119 = vld [vmem:[%s4 + $0x38] sm:$0xff]
  %v120 = vmul.f32 %v112, 0.60653067
  %v121 = vmul.f32 %v113, 0.60653067
  %v122 = vmul.f32 %v114, 0.60653067
  %v123 = vmul.f32 %v115, 0.60653067
  %v124 = vmul.f32 %v116, 0.60653067
  %v125 = vmul.f32 %v117, 0.60653067
  %v126 = vmul.f32 %v118, 0.60653067
  %v127 = vmul.f32 %v119, 0.60653067
  %v128 = vld [vmem:[%s5] sm:$0xff]
  %v129 = vld [vmem:[%s5 + $0x8] sm:$0xff]
  %v130 = vld [vmem:[%s5 + $0x10] sm:$0xff]
  %v131 = vld [vmem:[%s5 + $0x18] sm:$0xff]
  %v132 = vld [vmem:[%s5 + $0x20] sm:$0xff]
  %v133 = vld [vmem:[%s5 + $0x28] sm:$0xff]
  %v134 = vld [vmem:[%s5 + $0x30] sm:$0xff]
  %v135 = vld [vmem:[%s5 + $0x38] sm:$0xff]
  %v136 = vmul.f32 %v128, 0.60653067
  %v137 = vmul.f32 %v129, 0.60653067
  %v138 = vmul.f32 %v130, 0.60653067
  %v139 = vmul.f32 %v131, 0.60653067
  %v140 = vmul.f32 %v132, 0.60653067
  %v141 = vmul.f32 %v133, 0.60653067
  %v142 = vmul.f32 %v134, 0.60653067
  %v143 = vmul.f32 %v135, 0.60653067
  %v144 = vld [vmem:[%s6] sm:$0xff]
  %v145 = vld [vmem:[%s6 + $0x8] sm:$0xff]
  %v146 = vld [vmem:[%s6 + $0x10] sm:$0xff]
  %v147 = vld [vmem:[%s6 + $0x18] sm:$0xff]
  %v148 = vld [vmem:[%s6 + $0x20] sm:$0xff]
  %v149 = vld [vmem:[%s6 + $0x28] sm:$0xff]
  %v150 = vld [vmem:[%s6 + $0x30] sm:$0xff]
  %v151 = vld [vmem:[%s6 + $0x38] sm:$0xff]
  %v152 = vmul.f32 %v144, 0.60653067
  %v153 = vmul.f32 %v145, 0.60653067
  %v154 = vmul.f32 %v146, 0.60653067
  %v155 = vmul.f32 %v147, 0.60653067
  %v156 = vmul.f32 %v148, 0.60653067
  %v157 = vmul.f32 %v149, 0.60653067
  %v158 = vmul.f32 %v150, 0.60653067
  %v159 = vmul.f32 %v151, 0.60653067
  %v160 = vld [vmem:[%s7] sm:$0xff]
  %v161 = vld [vmem:[%s7 + $0x8] sm:$0xff]
  %v162 = vld [vmem:[%s7 + $0x10] sm:$0xff]
  %v163 = vld [vmem:[%s7 + $0x18] sm:$0xff]
  %v164 = vld [vmem:[%s7 + $0x20] sm:$0xff]
  %v165 = vld [vmem:[%s7 + $0x28] sm:$0xff]
  %v166 = vld [vmem:[%s7 + $0x30] sm:$0xff]
  %v167 = vld [vmem:[%s7 + $0x38] sm:$0xff]
  %v168 = vmul.f32 %v160, 0.60653067
  %v169 = vmul.f32 %v161, 0.60653067
  %v170 = vmul.f32 %v162, 0.60653067
  %v171 = vmul.f32 %v163, 0.60653067
  %v172 = vmul.f32 %v164, 0.60653067
  %v173 = vmul.f32 %v165, 0.60653067
  %v174 = vmul.f32 %v166, 0.60653067
  %v175 = vmul.f32 %v167, 0.60653067
  %v176 = vmul.f32 %v90, 0.5
  %v177 = vmul.f32 %v91, 0.5
  %v178 = vmul.f32 %v92, 0.5
  %v179 = vmul.f32 %v93, 0.5
  %v180 = vmul.f32 %v94, 0.5
  %v181 = vmul.f32 %v95, 0.5
  %v182 = vmul.f32 %v96, 0.5
  %v183 = vmul.f32 %v97, 0.5
  %v184 = vtanh.pop %v176
  %v185 = vtanh.pop %v177
  %v186 = vtanh.pop %v178
  %v187 = vtanh.pop %v179
  %v188 = vtanh.pop %v180
  %v189 = vtanh.pop %v181
  %v190 = vtanh.pop %v182
  %v191 = vtanh.pop %v183
  %192 = vrot.lane.b32.xlu0 %v184, 1
  %v193 = vpop.permute.xlu0 %192
  %194 = vrot.lane.b32.xlu0 %v185, 1
  %v195 = vpop.permute.xlu0 %194
  %196 = vrot.lane.b32.xlu0 %v186, 1
  %v197 = vpop.permute.xlu0 %196
  %198 = vrot.lane.b32.xlu0 %v187, 1
  %v199 = vpop.permute.xlu0 %198
  %200 = vrot.lane.b32.xlu0 %v188, 1
  %v201 = vpop.permute.xlu0 %200
  %202 = vrot.lane.b32.xlu0 %v189, 1
  %v203 = vpop.permute.xlu0 %202
  %204 = vrot.lane.b32.xlu0 %v190, 1
  %v205 = vpop.permute.xlu0 %204
  %206 = vrot.lane.b32.xlu0 %v191, 1
  %v207 = vpop.permute.xlu0 %206
  %v208 = vmul.f32 %v193, %v109
  %v209 = vmul.f32 %v195, %v109
  %v210 = vmul.f32 %v197, %v109
  %v211 = vmul.f32 %v199, %v109
  %v212 = vmul.f32 %v201, %v109
  %v213 = vmul.f32 %v203, %v109
  %v214 = vmul.f32 %v205, %v109
  %v215 = vmul.f32 %v207, %v109
  %v216 = vadd.f32 %v184, %v208
  %v217 = vadd.f32 %v185, %v209
  %v218 = vadd.f32 %v186, %v210
  %v219 = vadd.f32 %v187, %v211
  %v220 = vadd.f32 %v188, %v212
  %v221 = vadd.f32 %v189, %v213
  %v222 = vadd.f32 %v190, %v214
  %v223 = vadd.f32 %v191, %v215
  %224 = vrot.lane.b32.xlu0 %v184, 127
  %v225 = vpop.permute.xlu0 %224
  %226 = vrot.lane.b32.xlu0 %v185, 127
  %v227 = vpop.permute.xlu0 %226
  %228 = vrot.lane.b32.xlu0 %v186, 127
  %v229 = vpop.permute.xlu0 %228
  %230 = vrot.lane.b32.xlu0 %v187, 127
  %v231 = vpop.permute.xlu0 %230
  %232 = vrot.lane.b32.xlu0 %v188, 127
  %v233 = vpop.permute.xlu0 %232
  %234 = vrot.lane.b32.xlu0 %v189, 127
  %v235 = vpop.permute.xlu0 %234
  %236 = vrot.lane.b32.xlu0 %v190, 127
  %v237 = vpop.permute.xlu0 %236
  %238 = vrot.lane.b32.xlu0 %v191, 127
  %v239 = vpop.permute.xlu0 %238
  %v240 = vmul.f32 %v225, %v111
  %v241 = vmul.f32 %v227, %v111
  %v242 = vmul.f32 %v229, %v111
  %v243 = vmul.f32 %v231, %v111
  %v244 = vmul.f32 %v233, %v111
  %v245 = vmul.f32 %v235, %v111
  %v246 = vmul.f32 %v237, %v111
  %v247 = vmul.f32 %v239, %v111
  %v248 = vadd.f32 %v216, %v240
  %v249 = vadd.f32 %v217, %v241
  %v250 = vadd.f32 %v218, %v242
  %v251 = vadd.f32 %v219, %v243
  %v252 = vadd.f32 %v220, %v244
  %v253 = vadd.f32 %v221, %v245
  %v254 = vadd.f32 %v222, %v246
  %v255 = vadd.f32 %v223, %v247
  %v256 = vrot.slane %v248, 7
  %v257 = vrot.slane %v249, 7
  %v258 = vrot.slane %v250, 7
  %v259 = vrot.slane %v251, 7
  %v260 = vrot.slane %v252, 7
  %v261 = vrot.slane %v253, 7
  %v262 = vrot.slane %v254, 7
  %v263 = vrot.slane %v255, 7
  %v264 = vlaneseq
  %v265 = vshrl.u32 %v264, 7
  %vm266 = vcmp.lt.s32.totalorder %v265, 1
  %v267 = vsel %vm266, %v262, %v263
  %v268 = vsel %vm266, %v261, %v262
  %v269 = vsel %vm266, %v260, %v261
  %v270 = vsel %vm266, %v259, %v260
  %v271 = vsel %vm266, %v258, %v259
  %v272 = vsel %vm266, %v257, %v258
  %v273 = vsel %vm266, %v256, %v257
  %v274 = vsel %vm266, %v263, %v256
  %v275 = vmul.f32 %v274, %v120
  %v276 = vmul.f32 %v273, %v121
  %v277 = vmul.f32 %v272, %v122
  %v278 = vmul.f32 %v271, %v123
  %v279 = vmul.f32 %v270, %v124
  %v280 = vmul.f32 %v269, %v125
  %v281 = vmul.f32 %v268, %v126
  %v282 = vmul.f32 %v267, %v127
  %v283 = vadd.f32 %v248, %v275
  %v284 = vadd.f32 %v249, %v276
  %v285 = vadd.f32 %v250, %v277
  %v286 = vadd.f32 %v251, %v278
  %v287 = vadd.f32 %v252, %v279
  %v288 = vadd.f32 %v253, %v280
  %v289 = vadd.f32 %v254, %v281
  %v290 = vadd.f32 %v255, %v282
  %v291 = vrot.slane %v248, 1
  %v292 = vrot.slane %v249, 1
  %v293 = vrot.slane %v250, 1
  %v294 = vrot.slane %v251, 1
  %v295 = vrot.slane %v252, 1
  %v296 = vrot.slane %v253, 1
  %v297 = vrot.slane %v254, 1
  %v298 = vrot.slane %v255, 1
  %vm299 = vcmp.lt.s32.totalorder %v265, 7
  %v300 = vsel %vm299, %v297, %v298
  %v301 = vsel %vm299, %v296, %v297
  %v302 = vsel %vm299, %v295, %v296
  %v303 = vsel %vm299, %v294, %v295
  %v304 = vsel %vm299, %v293, %v294
  %v305 = vsel %vm299, %v292, %v293
  %v306 = vsel %vm299, %v291, %v292
  %v307 = vsel %vm299, %v298, %v291
  %v308 = vmul.f32 %v306, %v136
  %v309 = vmul.f32 %v305, %v137
  %v310 = vmul.f32 %v304, %v138
  %v311 = vmul.f32 %v303, %v139
  %v312 = vmul.f32 %v302, %v140
  %v313 = vmul.f32 %v301, %v141
  %v314 = vmul.f32 %v300, %v142
  %v315 = vmul.f32 %v307, %v143
  %v316 = vadd.f32 %v283, %v308
  %v317 = vadd.f32 %v284, %v309
  %v318 = vadd.f32 %v285, %v310
  %v319 = vadd.f32 %v286, %v311
  %v320 = vadd.f32 %v287, %v312
  %v321 = vadd.f32 %v288, %v313
  %v322 = vadd.f32 %v289, %v314
  %v323 = vadd.f32 %v290, %v315
  %v324 = vmul.f32 %v322, %v152
  %v325 = vmul.f32 %v323, %v153
  %v326 = vmul.f32 %v316, %v154
  %v327 = vmul.f32 %v317, %v155
  %v328 = vmul.f32 %v318, %v156
  %v329 = vmul.f32 %v319, %v157
  %v330 = vmul.f32 %v320, %v158
  %v331 = vmul.f32 %v321, %v159
  %v332 = vadd.f32 %v316, %v324
  %v333 = vadd.f32 %v317, %v325
  %v334 = vadd.f32 %v318, %v326
  %v335 = vadd.f32 %v319, %v327
  %v336 = vadd.f32 %v320, %v328
  %v337 = vadd.f32 %v321, %v329
  %v338 = vadd.f32 %v322, %v330
  %v339 = vadd.f32 %v323, %v331
  %v340 = vmul.f32 %v318, %v168
  %v341 = vmul.f32 %v319, %v169
  %v342 = vmul.f32 %v320, %v170
  %v343 = vmul.f32 %v321, %v171
  %v344 = vmul.f32 %v322, %v172
  %v345 = vmul.f32 %v323, %v173
  %v346 = vmul.f32 %v316, %v174
  %v347 = vmul.f32 %v317, %v175
  %v348 = vadd.f32 %v332, %v340
  %v349 = vadd.f32 %v333, %v341
  %v350 = vadd.f32 %v334, %v342
  %v351 = vadd.f32 %v335, %v343
  %v352 = vadd.f32 %v336, %v344
  %v353 = vadd.f32 %v337, %v345
  %v354 = vadd.f32 %v338, %v346
  %v355 = vadd.f32 %v339, %v347
  %v356 = vsub.f32 %v348, %v184
  %v357 = vsub.f32 %v349, %v185
  %v358 = vsub.f32 %v350, %v186
  %v359 = vsub.f32 %v351, %v187
  %v360 = vsub.f32 %v352, %v188
  %v361 = vsub.f32 %v353, %v189
  %v362 = vsub.f32 %v354, %v190
  %v363 = vsub.f32 %v355, %v191
  %v364 = vmul.f32 %v356, 0.10163863
  %v365 = vmul.f32 %v357, 0.10163863
  %v366 = vmul.f32 %v358, 0.10163863
  %v367 = vmul.f32 %v359, 0.10163863
  %v368 = vmul.f32 %v360, 0.10163863
  %v369 = vmul.f32 %v361, 0.10163863
  %v370 = vmul.f32 %v362, 0.10163863
  %v371 = vmul.f32 %v363, 0.10163863
  %v372 = vadd.f32 %v98, %v364
  %v373 = vadd.f32 %v99, %v365
  %v374 = vadd.f32 %v100, %v366
  %v375 = vadd.f32 %v101, %v367
  %v376 = vadd.f32 %v102, %v368
  %v377 = vadd.f32 %v103, %v369
  %v378 = vadd.f32 %v104, %v370
  %v379 = vadd.f32 %v105, %v371
  %v380 = vmul.f32 %v372, 0.5
  %v381 = vmul.f32 %v373, 0.5
  %v382 = vmul.f32 %v374, 0.5
  %v383 = vmul.f32 %v375, 0.5
  %v384 = vmul.f32 %v376, 0.5
  %v385 = vmul.f32 %v377, 0.5
  %v386 = vmul.f32 %v378, 0.5
  %v387 = vmul.f32 %v379, 0.5
  %v388 = vtanh.pop %v380
  %v389 = vtanh.pop %v381
  %v390 = vtanh.pop %v382
  %v391 = vtanh.pop %v383
  %v392 = vtanh.pop %v384
  %v393 = vtanh.pop %v385
  %v394 = vtanh.pop %v386
  %v395 = vtanh.pop %v387
  %396 = vrot.lane.b32.xlu0 %v388, 1
  %v397 = vpop.permute.xlu0 %396
  %398 = vrot.lane.b32.xlu0 %v389, 1
  %v399 = vpop.permute.xlu0 %398
  %400 = vrot.lane.b32.xlu0 %v390, 1
  %v401 = vpop.permute.xlu0 %400
  %402 = vrot.lane.b32.xlu0 %v391, 1
  %v403 = vpop.permute.xlu0 %402
  %404 = vrot.lane.b32.xlu0 %v392, 1
  %v405 = vpop.permute.xlu0 %404
  %406 = vrot.lane.b32.xlu0 %v393, 1
  %v407 = vpop.permute.xlu0 %406
  %408 = vrot.lane.b32.xlu0 %v394, 1
  %v409 = vpop.permute.xlu0 %408
  %410 = vrot.lane.b32.xlu0 %v395, 1
  %v411 = vpop.permute.xlu0 %410
  %v412 = vmul.f32 %v397, %v109
  %v413 = vmul.f32 %v399, %v109
  %v414 = vmul.f32 %v401, %v109
  %v415 = vmul.f32 %v403, %v109
  %v416 = vmul.f32 %v405, %v109
  %v417 = vmul.f32 %v407, %v109
  %v418 = vmul.f32 %v409, %v109
  %v419 = vmul.f32 %v411, %v109
  %v420 = vadd.f32 %v388, %v412
  %v421 = vadd.f32 %v389, %v413
  %v422 = vadd.f32 %v390, %v414
  %v423 = vadd.f32 %v391, %v415
  %v424 = vadd.f32 %v392, %v416
  %v425 = vadd.f32 %v393, %v417
  %v426 = vadd.f32 %v394, %v418
  %v427 = vadd.f32 %v395, %v419
  %428 = vrot.lane.b32.xlu0 %v388, 127
  %v429 = vpop.permute.xlu0 %428
  %430 = vrot.lane.b32.xlu0 %v389, 127
  %v431 = vpop.permute.xlu0 %430
  %432 = vrot.lane.b32.xlu0 %v390, 127
  %v433 = vpop.permute.xlu0 %432
  %434 = vrot.lane.b32.xlu0 %v391, 127
  %v435 = vpop.permute.xlu0 %434
  %436 = vrot.lane.b32.xlu0 %v392, 127
  %v437 = vpop.permute.xlu0 %436
  %438 = vrot.lane.b32.xlu0 %v393, 127
  %v439 = vpop.permute.xlu0 %438
  %440 = vrot.lane.b32.xlu0 %v394, 127
  %v441 = vpop.permute.xlu0 %440
  %442 = vrot.lane.b32.xlu0 %v395, 127
  %v443 = vpop.permute.xlu0 %442
  %v444 = vmul.f32 %v429, %v111
  %v445 = vmul.f32 %v431, %v111
  %v446 = vmul.f32 %v433, %v111
  %v447 = vmul.f32 %v435, %v111
  %v448 = vmul.f32 %v437, %v111
  %v449 = vmul.f32 %v439, %v111
  %v450 = vmul.f32 %v441, %v111
  %v451 = vmul.f32 %v443, %v111
  %v452 = vadd.f32 %v420, %v444
  %v453 = vadd.f32 %v421, %v445
  %v454 = vadd.f32 %v422, %v446
  %v455 = vadd.f32 %v423, %v447
  %v456 = vadd.f32 %v424, %v448
  %v457 = vadd.f32 %v425, %v449
  %v458 = vadd.f32 %v426, %v450
  %v459 = vadd.f32 %v427, %v451
  %v460 = vrot.slane %v452, 7
  %v461 = vrot.slane %v453, 7
  %v462 = vrot.slane %v454, 7
  %v463 = vrot.slane %v455, 7
  %v464 = vrot.slane %v456, 7
  %v465 = vrot.slane %v457, 7
  %v466 = vrot.slane %v458, 7
  %v467 = vrot.slane %v459, 7
  %v468 = vsel %vm266, %v466, %v467
  %v469 = vsel %vm266, %v465, %v466
  %v470 = vsel %vm266, %v464, %v465
  %v471 = vsel %vm266, %v463, %v464
  %v472 = vsel %vm266, %v462, %v463
  %v473 = vsel %vm266, %v461, %v462
  %v474 = vsel %vm266, %v460, %v461
  %v475 = vsel %vm266, %v467, %v460
  %v476 = vmul.f32 %v475, %v120
  %v477 = vmul.f32 %v474, %v121
  %v478 = vmul.f32 %v473, %v122
  %v479 = vmul.f32 %v472, %v123
  %v480 = vmul.f32 %v471, %v124
  %v481 = vmul.f32 %v470, %v125
  %v482 = vmul.f32 %v469, %v126
  %v483 = vmul.f32 %v468, %v127
  %v484 = vadd.f32 %v452, %v476
  %v485 = vadd.f32 %v453, %v477
  %v486 = vadd.f32 %v454, %v478
  %v487 = vadd.f32 %v455, %v479
  %v488 = vadd.f32 %v456, %v480
  %v489 = vadd.f32 %v457, %v481
  %v490 = vadd.f32 %v458, %v482
  %v491 = vadd.f32 %v459, %v483
  %v492 = vrot.slane %v452, 1
  %v493 = vrot.slane %v453, 1
  %v494 = vrot.slane %v454, 1
  %v495 = vrot.slane %v455, 1
  %v496 = vrot.slane %v456, 1
  %v497 = vrot.slane %v457, 1
  %v498 = vrot.slane %v458, 1
  %v499 = vrot.slane %v459, 1
  %v500 = vsel %vm299, %v498, %v499
  %v501 = vsel %vm299, %v497, %v498
  %v502 = vsel %vm299, %v496, %v497
  %v503 = vsel %vm299, %v495, %v496
  %v504 = vsel %vm299, %v494, %v495
  %v505 = vsel %vm299, %v493, %v494
  %v506 = vsel %vm299, %v492, %v493
  %v507 = vsel %vm299, %v499, %v492
  %v508 = vmul.f32 %v506, %v136
  %v509 = vmul.f32 %v505, %v137
  %v510 = vmul.f32 %v504, %v138
  %v511 = vmul.f32 %v503, %v139
  %v512 = vmul.f32 %v502, %v140
  %v513 = vmul.f32 %v501, %v141
  %v514 = vmul.f32 %v500, %v142
  %v515 = vmul.f32 %v507, %v143
  %v516 = vadd.f32 %v484, %v508
  %v517 = vadd.f32 %v485, %v509
  %v518 = vadd.f32 %v486, %v510
  %v519 = vadd.f32 %v487, %v511
  %v520 = vadd.f32 %v488, %v512
  %v521 = vadd.f32 %v489, %v513
  %v522 = vadd.f32 %v490, %v514
  %v523 = vadd.f32 %v491, %v515
  %v524 = vmul.f32 %v522, %v152
  %v525 = vmul.f32 %v523, %v153
  %v526 = vmul.f32 %v516, %v154
  %v527 = vmul.f32 %v517, %v155
  %v528 = vmul.f32 %v518, %v156
  %v529 = vmul.f32 %v519, %v157
  %v530 = vmul.f32 %v520, %v158
  %v531 = vmul.f32 %v521, %v159
  %v532 = vadd.f32 %v516, %v524
  %v533 = vadd.f32 %v517, %v525
  %v534 = vadd.f32 %v518, %v526
  %v535 = vadd.f32 %v519, %v527
  %v536 = vadd.f32 %v520, %v528
  %v537 = vadd.f32 %v521, %v529
  %v538 = vadd.f32 %v522, %v530
  %v539 = vadd.f32 %v523, %v531
  %v540 = vmul.f32 %v518, %v168
  %v541 = vmul.f32 %v519, %v169
  %v542 = vmul.f32 %v520, %v170
  %v543 = vmul.f32 %v521, %v171
  %v544 = vmul.f32 %v522, %v172
  %v545 = vmul.f32 %v523, %v173
  %v546 = vmul.f32 %v516, %v174
  %v547 = vmul.f32 %v517, %v175
  %v548 = vadd.f32 %v532, %v540
  %v549 = vadd.f32 %v533, %v541
  %v550 = vadd.f32 %v534, %v542
  %v551 = vadd.f32 %v535, %v543
  %v552 = vadd.f32 %v536, %v544
  %v553 = vadd.f32 %v537, %v545
  %v554 = vadd.f32 %v538, %v546
  %v555 = vadd.f32 %v539, %v547
  %v556 = vsub.f32 %v548, %v388
  %v557 = vsub.f32 %v549, %v389
  %v558 = vsub.f32 %v550, %v390
  %v559 = vsub.f32 %v551, %v391
  %v560 = vsub.f32 %v552, %v392
  %v561 = vsub.f32 %v553, %v393
  %v562 = vsub.f32 %v554, %v394
  %v563 = vsub.f32 %v555, %v395
  %v564 = vmul.f32 %v556, 0.10163863
  %v565 = vmul.f32 %v557, 0.10163863
  %v566 = vmul.f32 %v558, 0.10163863
  %v567 = vmul.f32 %v559, 0.10163863
  %v568 = vmul.f32 %v560, 0.10163863
  %v569 = vmul.f32 %v561, 0.10163863
  %v570 = vmul.f32 %v562, 0.10163863
  %v571 = vmul.f32 %v563, 0.10163863
  %v572 = vadd.f32 %v98, %v564
  %v573 = vadd.f32 %v99, %v565
  %v574 = vadd.f32 %v100, %v566
  %v575 = vadd.f32 %v101, %v567
  %v576 = vadd.f32 %v102, %v568
  %v577 = vadd.f32 %v103, %v569
  %v578 = vadd.f32 %v104, %v570
  %v579 = vadd.f32 %v105, %v571
  %v580 = vmul.f32 %v572, 0.5
  %v581 = vmul.f32 %v573, 0.5
  %v582 = vmul.f32 %v574, 0.5
  %v583 = vmul.f32 %v575, 0.5
  %v584 = vmul.f32 %v576, 0.5
  %v585 = vmul.f32 %v577, 0.5
  %v586 = vmul.f32 %v578, 0.5
  %v587 = vmul.f32 %v579, 0.5
  %v588 = vtanh.pop %v580
  %v589 = vtanh.pop %v581
  %v590 = vtanh.pop %v582
  %v591 = vtanh.pop %v583
  %v592 = vtanh.pop %v584
  %v593 = vtanh.pop %v585
  %v594 = vtanh.pop %v586
  %v595 = vtanh.pop %v587
  %596 = vrot.lane.b32.xlu0 %v588, 1
  %v597 = vpop.permute.xlu0 %596
  %598 = vrot.lane.b32.xlu0 %v589, 1
  %v599 = vpop.permute.xlu0 %598
  %600 = vrot.lane.b32.xlu0 %v590, 1
  %v601 = vpop.permute.xlu0 %600
  %602 = vrot.lane.b32.xlu0 %v591, 1
  %v603 = vpop.permute.xlu0 %602
  %604 = vrot.lane.b32.xlu0 %v592, 1
  %v605 = vpop.permute.xlu0 %604
  %606 = vrot.lane.b32.xlu0 %v593, 1
  %v607 = vpop.permute.xlu0 %606
  %608 = vrot.lane.b32.xlu0 %v594, 1
  %v609 = vpop.permute.xlu0 %608
  %610 = vrot.lane.b32.xlu0 %v595, 1
  %v611 = vpop.permute.xlu0 %610
  %v612 = vmul.f32 %v597, %v109
  %v613 = vmul.f32 %v599, %v109
  %v614 = vmul.f32 %v601, %v109
  %v615 = vmul.f32 %v603, %v109
  %v616 = vmul.f32 %v605, %v109
  %v617 = vmul.f32 %v607, %v109
  %v618 = vmul.f32 %v609, %v109
  %v619 = vmul.f32 %v611, %v109
  %v620 = vadd.f32 %v588, %v612
  %v621 = vadd.f32 %v589, %v613
  %v622 = vadd.f32 %v590, %v614
  %v623 = vadd.f32 %v591, %v615
  %v624 = vadd.f32 %v592, %v616
  %v625 = vadd.f32 %v593, %v617
  %v626 = vadd.f32 %v594, %v618
  %v627 = vadd.f32 %v595, %v619
  %628 = vrot.lane.b32.xlu0 %v588, 127
  %v629 = vpop.permute.xlu0 %628
  %630 = vrot.lane.b32.xlu0 %v589, 127
  %v631 = vpop.permute.xlu0 %630
  %632 = vrot.lane.b32.xlu0 %v590, 127
  %v633 = vpop.permute.xlu0 %632
  %634 = vrot.lane.b32.xlu0 %v591, 127
  %v635 = vpop.permute.xlu0 %634
  %636 = vrot.lane.b32.xlu0 %v592, 127
  %v637 = vpop.permute.xlu0 %636
  %638 = vrot.lane.b32.xlu0 %v593, 127
  %v639 = vpop.permute.xlu0 %638
  %640 = vrot.lane.b32.xlu0 %v594, 127
  %v641 = vpop.permute.xlu0 %640
  %642 = vrot.lane.b32.xlu0 %v595, 127
  %v643 = vpop.permute.xlu0 %642
  %v644 = vmul.f32 %v629, %v111
  %v645 = vmul.f32 %v631, %v111
  %v646 = vmul.f32 %v633, %v111
  %v647 = vmul.f32 %v635, %v111
  %v648 = vmul.f32 %v637, %v111
  %v649 = vmul.f32 %v639, %v111
  %v650 = vmul.f32 %v641, %v111
  %v651 = vmul.f32 %v643, %v111
  %v652 = vadd.f32 %v620, %v644
  %v653 = vadd.f32 %v621, %v645
  %v654 = vadd.f32 %v622, %v646
  %v655 = vadd.f32 %v623, %v647
  %v656 = vadd.f32 %v624, %v648
  %v657 = vadd.f32 %v625, %v649
  %v658 = vadd.f32 %v626, %v650
  %v659 = vadd.f32 %v627, %v651
  %v660 = vrot.slane %v652, 7
  %v661 = vrot.slane %v653, 7
  %v662 = vrot.slane %v654, 7
  %v663 = vrot.slane %v655, 7
  %v664 = vrot.slane %v656, 7
  %v665 = vrot.slane %v657, 7
  %v666 = vrot.slane %v658, 7
  %v667 = vrot.slane %v659, 7
  %v668 = vsel %vm266, %v666, %v667
  %v669 = vsel %vm266, %v665, %v666
  %v670 = vsel %vm266, %v664, %v665
  %v671 = vsel %vm266, %v663, %v664
  %v672 = vsel %vm266, %v662, %v663
  %v673 = vsel %vm266, %v661, %v662
  %v674 = vsel %vm266, %v660, %v661
  %v675 = vsel %vm266, %v667, %v660
  %v676 = vmul.f32 %v675, %v120
  %v677 = vmul.f32 %v674, %v121
  %v678 = vmul.f32 %v673, %v122
  %v679 = vmul.f32 %v672, %v123
  %v680 = vmul.f32 %v671, %v124
  %v681 = vmul.f32 %v670, %v125
  %v682 = vmul.f32 %v669, %v126
  %v683 = vmul.f32 %v668, %v127
  %v684 = vadd.f32 %v652, %v676
  %v685 = vadd.f32 %v653, %v677
  %v686 = vadd.f32 %v654, %v678
  %v687 = vadd.f32 %v655, %v679
  %v688 = vadd.f32 %v656, %v680
  %v689 = vadd.f32 %v657, %v681
  %v690 = vadd.f32 %v658, %v682
  %v691 = vadd.f32 %v659, %v683
  %v692 = vrot.slane %v652, 1
  %v693 = vrot.slane %v653, 1
  %v694 = vrot.slane %v654, 1
  %v695 = vrot.slane %v655, 1
  %v696 = vrot.slane %v656, 1
  %v697 = vrot.slane %v657, 1
  %v698 = vrot.slane %v658, 1
  %v699 = vrot.slane %v659, 1
  %v700 = vsel %vm299, %v698, %v699
  %v701 = vsel %vm299, %v697, %v698
  %v702 = vsel %vm299, %v696, %v697
  %v703 = vsel %vm299, %v695, %v696
  %v704 = vsel %vm299, %v694, %v695
  %v705 = vsel %vm299, %v693, %v694
  %v706 = vsel %vm299, %v692, %v693
  %v707 = vsel %vm299, %v699, %v692
  %v708 = vmul.f32 %v706, %v136
  %v709 = vmul.f32 %v705, %v137
  %v710 = vmul.f32 %v704, %v138
  %v711 = vmul.f32 %v703, %v139
  %v712 = vmul.f32 %v702, %v140
  %v713 = vmul.f32 %v701, %v141
  %v714 = vmul.f32 %v700, %v142
  %v715 = vmul.f32 %v707, %v143
  %v716 = vadd.f32 %v684, %v708
  %v717 = vadd.f32 %v685, %v709
  %v718 = vadd.f32 %v686, %v710
  %v719 = vadd.f32 %v687, %v711
  %v720 = vadd.f32 %v688, %v712
  %v721 = vadd.f32 %v689, %v713
  %v722 = vadd.f32 %v690, %v714
  %v723 = vadd.f32 %v691, %v715
  %v724 = vmul.f32 %v722, %v152
  %v725 = vmul.f32 %v723, %v153
  %v726 = vmul.f32 %v716, %v154
  %v727 = vmul.f32 %v717, %v155
  %v728 = vmul.f32 %v718, %v156
  %v729 = vmul.f32 %v719, %v157
  %v730 = vmul.f32 %v720, %v158
  %v731 = vmul.f32 %v721, %v159
  %v732 = vadd.f32 %v716, %v724
  %v733 = vadd.f32 %v717, %v725
  %v734 = vadd.f32 %v718, %v726
  %v735 = vadd.f32 %v719, %v727
  %v736 = vadd.f32 %v720, %v728
  %v737 = vadd.f32 %v721, %v729
  %v738 = vadd.f32 %v722, %v730
  %v739 = vadd.f32 %v723, %v731
  %v740 = vmul.f32 %v718, %v168
  %v741 = vmul.f32 %v719, %v169
  %v742 = vmul.f32 %v720, %v170
  %v743 = vmul.f32 %v721, %v171
  %v744 = vmul.f32 %v722, %v172
  %v745 = vmul.f32 %v723, %v173
  %v746 = vmul.f32 %v716, %v174
  %v747 = vmul.f32 %v717, %v175
  %v748 = vadd.f32 %v732, %v740
  %v749 = vadd.f32 %v733, %v741
  %v750 = vadd.f32 %v734, %v742
  %v751 = vadd.f32 %v735, %v743
  %v752 = vadd.f32 %v736, %v744
  %v753 = vadd.f32 %v737, %v745
  %v754 = vadd.f32 %v738, %v746
  %v755 = vadd.f32 %v739, %v747
  %v756 = vsub.f32 %v748, %v588
  %v757 = vsub.f32 %v749, %v589
  %v758 = vsub.f32 %v750, %v590
  %v759 = vsub.f32 %v751, %v591
  %v760 = vsub.f32 %v752, %v592
  %v761 = vsub.f32 %v753, %v593
  %v762 = vsub.f32 %v754, %v594
  %v763 = vsub.f32 %v755, %v595
  %v764 = vmul.f32 %v756, 0.10163863
  %v765 = vmul.f32 %v757, 0.10163863
  %v766 = vmul.f32 %v758, 0.10163863
  %v767 = vmul.f32 %v759, 0.10163863
  %v768 = vmul.f32 %v760, 0.10163863
  %v769 = vmul.f32 %v761, 0.10163863
  %v770 = vmul.f32 %v762, 0.10163863
  %v771 = vmul.f32 %v763, 0.10163863
  %v772 = vadd.f32 %v98, %v764
  %v773 = vadd.f32 %v99, %v765
  %v774 = vadd.f32 %v100, %v766
  %v775 = vadd.f32 %v101, %v767
  %v776 = vadd.f32 %v102, %v768
  %v777 = vadd.f32 %v103, %v769
  %v778 = vadd.f32 %v104, %v770
  %v779 = vadd.f32 %v105, %v771
  %v780 = vmul.f32 %v772, 0.5
  %v781 = vmul.f32 %v773, 0.5
  %v782 = vmul.f32 %v774, 0.5
  %v783 = vmul.f32 %v775, 0.5
  %v784 = vmul.f32 %v776, 0.5
  %v785 = vmul.f32 %v777, 0.5
  %v786 = vmul.f32 %v778, 0.5
  %v787 = vmul.f32 %v779, 0.5
  %v788 = vtanh.pop %v780
  %v789 = vtanh.pop %v781
  %v790 = vtanh.pop %v782
  %v791 = vtanh.pop %v783
  %v792 = vtanh.pop %v784
  %v793 = vtanh.pop %v785
  %v794 = vtanh.pop %v786
  %v795 = vtanh.pop %v787
  %796 = vrot.lane.b32.xlu0 %v788, 1
  %v797 = vpop.permute.xlu0 %796
  %798 = vrot.lane.b32.xlu0 %v789, 1
  %v799 = vpop.permute.xlu0 %798
  %800 = vrot.lane.b32.xlu0 %v790, 1
  %v801 = vpop.permute.xlu0 %800
  %802 = vrot.lane.b32.xlu0 %v791, 1
  %v803 = vpop.permute.xlu0 %802
  %804 = vrot.lane.b32.xlu0 %v792, 1
  %v805 = vpop.permute.xlu0 %804
  %806 = vrot.lane.b32.xlu0 %v793, 1
  %v807 = vpop.permute.xlu0 %806
  %808 = vrot.lane.b32.xlu0 %v794, 1
  %v809 = vpop.permute.xlu0 %808
  %810 = vrot.lane.b32.xlu0 %v795, 1
  %v811 = vpop.permute.xlu0 %810
  %v812 = vmul.f32 %v797, %v109
  %v813 = vmul.f32 %v799, %v109
  %v814 = vmul.f32 %v801, %v109
  %v815 = vmul.f32 %v803, %v109
  %v816 = vmul.f32 %v805, %v109
  %v817 = vmul.f32 %v807, %v109
  %v818 = vmul.f32 %v809, %v109
  %v819 = vmul.f32 %v811, %v109
  %v820 = vadd.f32 %v788, %v812
  %v821 = vadd.f32 %v789, %v813
  %v822 = vadd.f32 %v790, %v814
  %v823 = vadd.f32 %v791, %v815
  %v824 = vadd.f32 %v792, %v816
  %v825 = vadd.f32 %v793, %v817
  %v826 = vadd.f32 %v794, %v818
  %v827 = vadd.f32 %v795, %v819
  %828 = vrot.lane.b32.xlu0 %v788, 127
  %v829 = vpop.permute.xlu0 %828
  %830 = vrot.lane.b32.xlu0 %v789, 127
  %v831 = vpop.permute.xlu0 %830
  %832 = vrot.lane.b32.xlu0 %v790, 127
  %v833 = vpop.permute.xlu0 %832
  %834 = vrot.lane.b32.xlu0 %v791, 127
  %v835 = vpop.permute.xlu0 %834
  %836 = vrot.lane.b32.xlu0 %v792, 127
  %v837 = vpop.permute.xlu0 %836
  %838 = vrot.lane.b32.xlu0 %v793, 127
  %v839 = vpop.permute.xlu0 %838
  %840 = vrot.lane.b32.xlu0 %v794, 127
  %v841 = vpop.permute.xlu0 %840
  %842 = vrot.lane.b32.xlu0 %v795, 127
  %v843 = vpop.permute.xlu0 %842
  %v844 = vmul.f32 %v829, %v111
  %v845 = vmul.f32 %v831, %v111
  %v846 = vmul.f32 %v833, %v111
  %v847 = vmul.f32 %v835, %v111
  %v848 = vmul.f32 %v837, %v111
  %v849 = vmul.f32 %v839, %v111
  %v850 = vmul.f32 %v841, %v111
  %v851 = vmul.f32 %v843, %v111
  %v852 = vadd.f32 %v820, %v844
  %v853 = vadd.f32 %v821, %v845
  %v854 = vadd.f32 %v822, %v846
  %v855 = vadd.f32 %v823, %v847
  %v856 = vadd.f32 %v824, %v848
  %v857 = vadd.f32 %v825, %v849
  %v858 = vadd.f32 %v826, %v850
  %v859 = vadd.f32 %v827, %v851
  %v860 = vrot.slane %v852, 7
  %v861 = vrot.slane %v853, 7
  %v862 = vrot.slane %v854, 7
  %v863 = vrot.slane %v855, 7
  %v864 = vrot.slane %v856, 7
  %v865 = vrot.slane %v857, 7
  %v866 = vrot.slane %v858, 7
  %v867 = vrot.slane %v859, 7
  %v868 = vsel %vm266, %v866, %v867
  %v869 = vsel %vm266, %v865, %v866
  %v870 = vsel %vm266, %v864, %v865
  %v871 = vsel %vm266, %v863, %v864
  %v872 = vsel %vm266, %v862, %v863
  %v873 = vsel %vm266, %v861, %v862
  %v874 = vsel %vm266, %v860, %v861
  %v875 = vsel %vm266, %v867, %v860
  %v876 = vmul.f32 %v875, %v120
  %v877 = vmul.f32 %v874, %v121
  %v878 = vmul.f32 %v873, %v122
  %v879 = vmul.f32 %v872, %v123
  %v880 = vmul.f32 %v871, %v124
  %v881 = vmul.f32 %v870, %v125
  %v882 = vmul.f32 %v869, %v126
  %v883 = vmul.f32 %v868, %v127
  %v884 = vadd.f32 %v852, %v876
  %v885 = vadd.f32 %v853, %v877
  %v886 = vadd.f32 %v854, %v878
  %v887 = vadd.f32 %v855, %v879
  %v888 = vadd.f32 %v856, %v880
  %v889 = vadd.f32 %v857, %v881
  %v890 = vadd.f32 %v858, %v882
  %v891 = vadd.f32 %v859, %v883
  %v892 = vrot.slane %v852, 1
  %v893 = vrot.slane %v853, 1
  %v894 = vrot.slane %v854, 1
  %v895 = vrot.slane %v855, 1
  %v896 = vrot.slane %v856, 1
  %v897 = vrot.slane %v857, 1
  %v898 = vrot.slane %v858, 1
  %v899 = vrot.slane %v859, 1
  %v900 = vsel %vm299, %v898, %v899
  %v901 = vsel %vm299, %v897, %v898
  %v902 = vsel %vm299, %v896, %v897
  %v903 = vsel %vm299, %v895, %v896
  %v904 = vsel %vm299, %v894, %v895
  %v905 = vsel %vm299, %v893, %v894
  %v906 = vsel %vm299, %v892, %v893
  %v907 = vsel %vm299, %v899, %v892
  %v908 = vmul.f32 %v906, %v136
  %v909 = vmul.f32 %v905, %v137
  %v910 = vmul.f32 %v904, %v138
  %v911 = vmul.f32 %v903, %v139
  %v912 = vmul.f32 %v902, %v140
  %v913 = vmul.f32 %v901, %v141
  %v914 = vmul.f32 %v900, %v142
  %v915 = vmul.f32 %v907, %v143
  %v916 = vadd.f32 %v884, %v908
  %v917 = vadd.f32 %v885, %v909
  %v918 = vadd.f32 %v886, %v910
  %v919 = vadd.f32 %v887, %v911
  %v920 = vadd.f32 %v888, %v912
  %v921 = vadd.f32 %v889, %v913
  %v922 = vadd.f32 %v890, %v914
  %v923 = vadd.f32 %v891, %v915
  %v924 = vmul.f32 %v922, %v152
  %v925 = vmul.f32 %v923, %v153
  %v926 = vmul.f32 %v916, %v154
  %v927 = vmul.f32 %v917, %v155
  %v928 = vmul.f32 %v918, %v156
  %v929 = vmul.f32 %v919, %v157
  %v930 = vmul.f32 %v920, %v158
  %v931 = vmul.f32 %v921, %v159
  %v932 = vadd.f32 %v916, %v924
  %v933 = vadd.f32 %v917, %v925
  %v934 = vadd.f32 %v918, %v926
  %v935 = vadd.f32 %v919, %v927
  %v936 = vadd.f32 %v920, %v928
  %v937 = vadd.f32 %v921, %v929
  %v938 = vadd.f32 %v922, %v930
  %v939 = vadd.f32 %v923, %v931
  %v940 = vmul.f32 %v918, %v168
  %v941 = vmul.f32 %v919, %v169
  %v942 = vmul.f32 %v920, %v170
  %v943 = vmul.f32 %v921, %v171
  %v944 = vmul.f32 %v922, %v172
  %v945 = vmul.f32 %v923, %v173
  %v946 = vmul.f32 %v916, %v174
  %v947 = vmul.f32 %v917, %v175
  %v948 = vadd.f32 %v932, %v940
  %v949 = vadd.f32 %v933, %v941
  %v950 = vadd.f32 %v934, %v942
  %v951 = vadd.f32 %v935, %v943
  %v952 = vadd.f32 %v936, %v944
  %v953 = vadd.f32 %v937, %v945
  %v954 = vadd.f32 %v938, %v946
  %v955 = vadd.f32 %v939, %v947
  %v956 = vsub.f32 %v948, %v788
  %v957 = vsub.f32 %v949, %v789
  %v958 = vsub.f32 %v950, %v790
  %v959 = vsub.f32 %v951, %v791
  %v960 = vsub.f32 %v952, %v792
  %v961 = vsub.f32 %v953, %v793
  %v962 = vsub.f32 %v954, %v794
  %v963 = vsub.f32 %v955, %v795
  %v964 = vmul.f32 %v956, 0.10163863
  %v965 = vmul.f32 %v957, 0.10163863
  %v966 = vmul.f32 %v958, 0.10163863
  %v967 = vmul.f32 %v959, 0.10163863
  %v968 = vmul.f32 %v960, 0.10163863
  %v969 = vmul.f32 %v961, 0.10163863
  %v970 = vmul.f32 %v962, 0.10163863
  %v971 = vmul.f32 %v963, 0.10163863
  %v972 = vadd.f32 %v98, %v964
  %v973 = vadd.f32 %v99, %v965
  %v974 = vadd.f32 %v100, %v966
  %v975 = vadd.f32 %v101, %v967
  %v976 = vadd.f32 %v102, %v968
  %v977 = vadd.f32 %v103, %v969
  %v978 = vadd.f32 %v104, %v970
  %v979 = vadd.f32 %v105, %v971
  %v980 = vmul.f32 %v972, 0.5
  %v981 = vmul.f32 %v973, 0.5
  %v982 = vmul.f32 %v974, 0.5
  %v983 = vmul.f32 %v975, 0.5
  %v984 = vmul.f32 %v976, 0.5
  %v985 = vmul.f32 %v977, 0.5
  %v986 = vmul.f32 %v978, 0.5
  %v987 = vmul.f32 %v979, 0.5
  %v988 = vtanh.pop %v980
  %v989 = vtanh.pop %v981
  %v990 = vtanh.pop %v982
  %v991 = vtanh.pop %v983
  %v992 = vtanh.pop %v984
  %v993 = vtanh.pop %v985
  %v994 = vtanh.pop %v986
  %v995 = vtanh.pop %v987
  %996 = vrot.lane.b32.xlu0 %v988, 1
  %v997 = vpop.permute.xlu0 %996
  %998 = vrot.lane.b32.xlu0 %v989, 1
  %v999 = vpop.permute.xlu0 %998
  %1000 = vrot.lane.b32.xlu0 %v990, 1
  %v1001 = vpop.permute.xlu0 %1000
  %1002 = vrot.lane.b32.xlu0 %v991, 1
  %v1003 = vpop.permute.xlu0 %1002
  %1004 = vrot.lane.b32.xlu0 %v992, 1
  %v1005 = vpop.permute.xlu0 %1004
  %1006 = vrot.lane.b32.xlu0 %v993, 1
  %v1007 = vpop.permute.xlu0 %1006
  %1008 = vrot.lane.b32.xlu0 %v994, 1
  %v1009 = vpop.permute.xlu0 %1008
  %1010 = vrot.lane.b32.xlu0 %v995, 1
  %v1011 = vpop.permute.xlu0 %1010
  %v1012 = vmul.f32 %v997, %v109
  %v1013 = vmul.f32 %v999, %v109
  %v1014 = vmul.f32 %v1001, %v109
  %v1015 = vmul.f32 %v1003, %v109
  %v1016 = vmul.f32 %v1005, %v109
  %v1017 = vmul.f32 %v1007, %v109
  %v1018 = vmul.f32 %v1009, %v109
  %v1019 = vmul.f32 %v1011, %v109
  %v1020 = vadd.f32 %v988, %v1012
  %v1021 = vadd.f32 %v989, %v1013
  %v1022 = vadd.f32 %v990, %v1014
  %v1023 = vadd.f32 %v991, %v1015
  %v1024 = vadd.f32 %v992, %v1016
  %v1025 = vadd.f32 %v993, %v1017
  %v1026 = vadd.f32 %v994, %v1018
  %v1027 = vadd.f32 %v995, %v1019
  %1028 = vrot.lane.b32.xlu0 %v988, 127
  %v1029 = vpop.permute.xlu0 %1028
  %1030 = vrot.lane.b32.xlu0 %v989, 127
  %v1031 = vpop.permute.xlu0 %1030
  %1032 = vrot.lane.b32.xlu0 %v990, 127
  %v1033 = vpop.permute.xlu0 %1032
  %1034 = vrot.lane.b32.xlu0 %v991, 127
  %v1035 = vpop.permute.xlu0 %1034
  %1036 = vrot.lane.b32.xlu0 %v992, 127
  %v1037 = vpop.permute.xlu0 %1036
  %1038 = vrot.lane.b32.xlu0 %v993, 127
  %v1039 = vpop.permute.xlu0 %1038
  %1040 = vrot.lane.b32.xlu0 %v994, 127
  %v1041 = vpop.permute.xlu0 %1040
  %1042 = vrot.lane.b32.xlu0 %v995, 127
  %v1043 = vpop.permute.xlu0 %1042
  %v1044 = vmul.f32 %v1029, %v111
  %v1045 = vmul.f32 %v1031, %v111
  %v1046 = vmul.f32 %v1033, %v111
  %v1047 = vmul.f32 %v1035, %v111
  %v1048 = vmul.f32 %v1037, %v111
  %v1049 = vmul.f32 %v1039, %v111
  %v1050 = vmul.f32 %v1041, %v111
  %v1051 = vmul.f32 %v1043, %v111
  %v1052 = vadd.f32 %v1020, %v1044
  %v1053 = vadd.f32 %v1021, %v1045
  %v1054 = vadd.f32 %v1022, %v1046
  %v1055 = vadd.f32 %v1023, %v1047
  %v1056 = vadd.f32 %v1024, %v1048
  %v1057 = vadd.f32 %v1025, %v1049
  %v1058 = vadd.f32 %v1026, %v1050
  %v1059 = vadd.f32 %v1027, %v1051
  %v1060 = vrot.slane %v1052, 7
  %v1061 = vrot.slane %v1053, 7
  %v1062 = vrot.slane %v1054, 7
  %v1063 = vrot.slane %v1055, 7
  %v1064 = vrot.slane %v1056, 7
  %v1065 = vrot.slane %v1057, 7
  %v1066 = vrot.slane %v1058, 7
  %v1067 = vrot.slane %v1059, 7
  %v1068 = vsel %vm266, %v1066, %v1067
  %v1069 = vsel %vm266, %v1065, %v1066
  %v1070 = vsel %vm266, %v1064, %v1065
  %v1071 = vsel %vm266, %v1063, %v1064
  %v1072 = vsel %vm266, %v1062, %v1063
  %v1073 = vsel %vm266, %v1061, %v1062
  %v1074 = vsel %vm266, %v1060, %v1061
  %v1075 = vsel %vm266, %v1067, %v1060
  %v1076 = vmul.f32 %v1075, %v120
  %v1077 = vmul.f32 %v1074, %v121
  %v1078 = vmul.f32 %v1073, %v122
  %v1079 = vmul.f32 %v1072, %v123
  %v1080 = vmul.f32 %v1071, %v124
  %v1081 = vmul.f32 %v1070, %v125
  %v1082 = vmul.f32 %v1069, %v126
  %v1083 = vmul.f32 %v1068, %v127
  %v1084 = vadd.f32 %v1052, %v1076
  %v1085 = vadd.f32 %v1053, %v1077
  %v1086 = vadd.f32 %v1054, %v1078
  %v1087 = vadd.f32 %v1055, %v1079
  %v1088 = vadd.f32 %v1056, %v1080
  %v1089 = vadd.f32 %v1057, %v1081
  %v1090 = vadd.f32 %v1058, %v1082
  %v1091 = vadd.f32 %v1059, %v1083
  %v1092 = vrot.slane %v1052, 1
  %v1093 = vrot.slane %v1053, 1
  %v1094 = vrot.slane %v1054, 1
  %v1095 = vrot.slane %v1055, 1
  %v1096 = vrot.slane %v1056, 1
  %v1097 = vrot.slane %v1057, 1
  %v1098 = vrot.slane %v1058, 1
  %v1099 = vrot.slane %v1059, 1
  %v1100 = vsel %vm299, %v1098, %v1099
  %v1101 = vsel %vm299, %v1097, %v1098
  %v1102 = vsel %vm299, %v1096, %v1097
  %v1103 = vsel %vm299, %v1095, %v1096
  %v1104 = vsel %vm299, %v1094, %v1095
  %v1105 = vsel %vm299, %v1093, %v1094
  %v1106 = vsel %vm299, %v1092, %v1093
  %v1107 = vsel %vm299, %v1099, %v1092
  %v1108 = vmul.f32 %v1106, %v136
  %v1109 = vmul.f32 %v1105, %v137
  %v1110 = vmul.f32 %v1104, %v138
  %v1111 = vmul.f32 %v1103, %v139
  %v1112 = vmul.f32 %v1102, %v140
  %v1113 = vmul.f32 %v1101, %v141
  %v1114 = vmul.f32 %v1100, %v142
  %v1115 = vmul.f32 %v1107, %v143
  %v1116 = vadd.f32 %v1084, %v1108
  %v1117 = vadd.f32 %v1085, %v1109
  %v1118 = vadd.f32 %v1086, %v1110
  %v1119 = vadd.f32 %v1087, %v1111
  %v1120 = vadd.f32 %v1088, %v1112
  %v1121 = vadd.f32 %v1089, %v1113
  %v1122 = vadd.f32 %v1090, %v1114
  %v1123 = vadd.f32 %v1091, %v1115
  %v1124 = vmul.f32 %v1122, %v152
  %v1125 = vmul.f32 %v1123, %v153
  %v1126 = vmul.f32 %v1116, %v154
  %v1127 = vmul.f32 %v1117, %v155
  %v1128 = vmul.f32 %v1118, %v156
  %v1129 = vmul.f32 %v1119, %v157
  %v1130 = vmul.f32 %v1120, %v158
  %v1131 = vmul.f32 %v1121, %v159
  %v1132 = vadd.f32 %v1116, %v1124
  %v1133 = vadd.f32 %v1117, %v1125
  %v1134 = vadd.f32 %v1118, %v1126
  %v1135 = vadd.f32 %v1119, %v1127
  %v1136 = vadd.f32 %v1120, %v1128
  %v1137 = vadd.f32 %v1121, %v1129
  %v1138 = vadd.f32 %v1122, %v1130
  %v1139 = vadd.f32 %v1123, %v1131
  %v1140 = vmul.f32 %v1118, %v168
  %v1141 = vmul.f32 %v1119, %v169
  %v1142 = vmul.f32 %v1120, %v170
  %v1143 = vmul.f32 %v1121, %v171
  %v1144 = vmul.f32 %v1122, %v172
  %v1145 = vmul.f32 %v1123, %v173
  %v1146 = vmul.f32 %v1116, %v174
  %v1147 = vmul.f32 %v1117, %v175
  %v1148 = vadd.f32 %v1132, %v1140
  %v1149 = vadd.f32 %v1133, %v1141
  %v1150 = vadd.f32 %v1134, %v1142
  %v1151 = vadd.f32 %v1135, %v1143
  %v1152 = vadd.f32 %v1136, %v1144
  %v1153 = vadd.f32 %v1137, %v1145
  %v1154 = vadd.f32 %v1138, %v1146
  %v1155 = vadd.f32 %v1139, %v1147
  %v1156 = vsub.f32 %v1148, %v988
  %v1157 = vsub.f32 %v1149, %v989
  %v1158 = vsub.f32 %v1150, %v990
  %v1159 = vsub.f32 %v1151, %v991
  %v1160 = vsub.f32 %v1152, %v992
  %v1161 = vsub.f32 %v1153, %v993
  %v1162 = vsub.f32 %v1154, %v994
  %v1163 = vsub.f32 %v1155, %v995
  %v1164 = vmul.f32 %v1156, 0.10163863
  %v1165 = vmul.f32 %v1157, 0.10163863
  %v1166 = vmul.f32 %v1158, 0.10163863
  %v1167 = vmul.f32 %v1159, 0.10163863
  %v1168 = vmul.f32 %v1160, 0.10163863
  %v1169 = vmul.f32 %v1161, 0.10163863
  %v1170 = vmul.f32 %v1162, 0.10163863
  %v1171 = vmul.f32 %v1163, 0.10163863
  %v1172 = vadd.f32 %v98, %v1164
  %v1173 = vadd.f32 %v99, %v1165
  %v1174 = vadd.f32 %v100, %v1166
  %v1175 = vadd.f32 %v101, %v1167
  %v1176 = vadd.f32 %v102, %v1168
  %v1177 = vadd.f32 %v103, %v1169
  %v1178 = vadd.f32 %v104, %v1170
  %v1179 = vadd.f32 %v105, %v1171
  %v1180 = vmul.f32 %v1172, 0.5
  %v1181 = vmul.f32 %v1173, 0.5
  %v1182 = vmul.f32 %v1174, 0.5
  %v1183 = vmul.f32 %v1175, 0.5
  %v1184 = vmul.f32 %v1176, 0.5
  %v1185 = vmul.f32 %v1177, 0.5
  %v1186 = vmul.f32 %v1178, 0.5
  %v1187 = vmul.f32 %v1179, 0.5
  %v1188 = vtanh.pop %v1180
  %v1189 = vtanh.pop %v1181
  %v1190 = vtanh.pop %v1182
  %v1191 = vtanh.pop %v1183
  %v1192 = vtanh.pop %v1184
  %v1193 = vtanh.pop %v1185
  %v1194 = vtanh.pop %v1186
  %v1195 = vtanh.pop %v1187
  %v1196 = vadd.f32 %v1188, 1.0
  %v1197 = vadd.f32 %v1189, 1.0
  %v1198 = vadd.f32 %v1190, 1.0
  %v1199 = vadd.f32 %v1191, 1.0
  %v1200 = vadd.f32 %v1192, 1.0
  %v1201 = vadd.f32 %v1193, 1.0
  %v1202 = vadd.f32 %v1194, 1.0
  %v1203 = vadd.f32 %v1195, 1.0
  %v1204 = vmul.f32 %v1196, 0.5
  %v1205 = vmul.f32 %v1197, 0.5
  %v1206 = vmul.f32 %v1198, 0.5
  %v1207 = vmul.f32 %v1199, 0.5
  %v1208 = vmul.f32 %v1200, 0.5
  %v1209 = vmul.f32 %v1201, 0.5
  %v1210 = vmul.f32 %v1202, 0.5
  %v1211 = vmul.f32 %v1203, 0.5
  %1212 = vst [vmem:[%s9] sm:$0xff] %v1204
  %1213 = vst [vmem:[%s9 + $0x8] sm:$0xff] %v1205
  %1214 = vst [vmem:[%s9 + $0x10] sm:$0xff] %v1206
  %1215 = vst [vmem:[%s9 + $0x18] sm:$0xff] %v1207
  %1216 = vst [vmem:[%s9 + $0x20] sm:$0xff] %v1208
  %1217 = vst [vmem:[%s9 + $0x28] sm:$0xff] %v1209
  %1218 = vst [vmem:[%s9 + $0x30] sm:$0xff] %v1210
  %1219 = vst [vmem:[%s9 + $0x38] sm:$0xff] %v1211
  %v1220 = vsub.f32 1.0, %v1188
  %v1221 = vsub.f32 1.0, %v1189
  %v1222 = vsub.f32 1.0, %v1190
  %v1223 = vsub.f32 1.0, %v1191
  %v1224 = vsub.f32 1.0, %v1192
  %v1225 = vsub.f32 1.0, %v1193
  %v1226 = vsub.f32 1.0, %v1194
  %v1227 = vsub.f32 1.0, %v1195
  %v1228 = vmul.f32 %v1220, 0.5
  %v1229 = vmul.f32 %v1221, 0.5
  %v1230 = vmul.f32 %v1222, 0.5
  %v1231 = vmul.f32 %v1223, 0.5
  %v1232 = vmul.f32 %v1224, 0.5
  %v1233 = vmul.f32 %v1225, 0.5
  %v1234 = vmul.f32 %v1226, 0.5
  %v1235 = vmul.f32 %v1227, 0.5
  %1236 = vst [vmem:[%s8] sm:$0xff] %v1228
  %1237 = vst [vmem:[%s8 + $0x8] sm:$0xff] %v1229
  %1238 = vst [vmem:[%s8 + $0x10] sm:$0xff] %v1230
  %1239 = vst [vmem:[%s8 + $0x18] sm:$0xff] %v1231
  %1240 = vst [vmem:[%s8 + $0x20] sm:$0xff] %v1232
  %1241 = vst [vmem:[%s8 + $0x28] sm:$0xff] %v1233
  %1242 = vst [vmem:[%s8 + $0x30] sm:$0xff] %v1234
  %1243 = vst [vmem:[%s8 + $0x38] sm:$0xff] %v1235
  // Predicated region
  $region34: #{_crf_forward.1} parent=0 // pred_check
    _
  $region35: #{_crf_forward.1} parent=0 // pred_check_branch
    %1245 = sbr.rel (0) target = $region37
  $region36: #{_crf_forward.1} parent=0 // pred_region
    _
  $region37: #{_crf_forward.1} parent=0 // pred_fallthru
    _
  // Predicated region
  $region38: #{_crf_forward.1} parent=0 // pred_check
    _
  $region39: #{_crf_forward.1} parent=0 // pred_check_branch
    %1247 = sbr.rel (0) target = $region41
  $region40: #{_crf_forward.1} parent=0 // pred_region
    _
  $region41: #{_crf_forward.1} parent=0 // pred_fallthru
    _
  // Predicated region
  $region42: #{_crf_forward.1} parent=0 // pred_check
    _
  $region43: #{_crf_forward.1} parent=0 // pred_check_branch
    %1249 = sbr.rel (0) target = $region45
  $region44: #{_crf_forward.1} parent=0 // pred_region
    _
  $region45: #{_crf_forward.1} parent=0 // pred_fallthru
    _
  // Predicated region
  $region46: #{_crf_forward.1} parent=0 // pred_check
    _
  $region47: #{_crf_forward.1} parent=0 // pred_check_branch
    %1251 = sbr.rel (0) target = $region49
  $region48: #{_crf_forward.1} parent=0 // pred_region
    _
  $region49: #{_crf_forward.1} parent=0 // pred_fallthru
    _

</llo_original>
